<compile_context>
chip_gen: v6e
topology: v6e:2x2x1
jax: 0.10.0
libtpu: 0.0.40
codegen_flags: <defaults>
</compile_context>

<pallas_src>
import functools

import jax
import jax.numpy as jnp
from jax.experimental import pallas as pl
from jax.experimental.pallas import tpu as pltpu


def _expand_ln_kernel(x_ref, w_ref, g_ref, b_ref, o_ref, *, eps, p, C, w_resident, j_axis):
    # x_ref : (TM, C)                      token tile (TM = RM * W tokens)
    # w_ref : (p, C, p*C) if w_resident    full transposed weight, resident in VMEM
    #         (1, C, p*C) otherwise        one p1-row chunk selected by BlockSpec
    # g_ref : (1, C)                       LayerNorm gamma
    # b_ref : (1, C)                       LayerNorm beta
    # o_ref : (RM, 1, W, p*C)              fused-rearrange output block (bh, p1, w, p2*c)
    if w_resident:
        w = w_ref[pl.program_id(j_axis)]          # (C, p*C) chunk for this p1 row
    else:
        w = w_ref[0]                              # (C, p*C)

    # Expand matmul for one p1 row of output pixels; f32 accumulation on the MXU.
    y = jnp.dot(x_ref[...], w, preferred_element_type=jnp.float32)   # (TM, p*C)

    RM = o_ref.shape[0]
    W = o_ref.shape[2]
    g = g_ref[...].astype(jnp.float32)
    b = b_ref[...].astype(jnp.float32)
    inv_c = jnp.float32(1.0 / C)

    # LayerNorm each C-wide segment (one per p2), single-pass mean / variance.
    for s in range(p):                                         # static unroll, p is small
        ys = y[:, s * C:(s + 1) * C]                           # (TM, C), lane-aligned view
        mean = jnp.sum(ys, axis=-1, keepdims=True) * inv_c
        msq = jnp.sum(ys * ys, axis=-1, keepdims=True) * inv_c
        var = msq - mean * mean                                # biased var (PyTorch LN)
        inv = jax.lax.rsqrt(var + eps)
        yn = (ys - mean) * inv * g + b
        o_ref[:, :, :, s * C:(s + 1) * C] = yn.reshape(RM, 1, W, C).astype(o_ref.dtype)


def final_patch_expand_x4(x, expand_w, gamma, beta, *, patch_size=4, eps=1e-5,
                          max_tokens_per_tile=512):
    """x: (B, H, W, C).  expand_w: (patch_size^2 * C, C) (PyTorch Linear layout)."""
    B, H, W, C = x.shape
    p = patch_size
    BH = B * H
    N = BH * W
    assert C % 128 == 0, "dim must be a multiple of 128 (lane width) for this kernel"
    assert W % 8 == 0, "W must be a multiple of 8 (sublanes) for this kernel"

    # Token tile: RM rows of the (B*H, W) token grid -> TM = RM * W tokens per step.
    RM = 1
    for d in range(1, BH + 1):
        if BH % d == 0 and d * W <= max_tokens_per_tile:
            RM = d
    TM = RM * W
    num_i = BH // RM

    x_flat = x.reshape(N, C)
    # w3[p1, k, p2*C + c] = expand_w[p1*p*C + p2*C + c, k]   (one-time, tiny host-side op)
    w3 = expand_w.T.reshape(C, p, p * C).transpose(1, 0, 2)
    g2 = gamma.reshape(1, C).astype(jnp.float32)
    b2 = beta.reshape(1, C).astype(jnp.float32)

    # Keep the whole weight resident in VMEM when small (single DMA); otherwise stream
    # one (C, p*C) chunk per outer grid step (each chunk DMA'd exactly once).
    w_bytes = p * p * C * C * w3.dtype.itemsize
    w_resident = (2 * w_bytes) <= (8 << 20)

    out_shape = jax.ShapeDtypeStruct((BH, p, W, p * C), x.dtype)
    kernel = functools.partial(_expand_ln_kernel, eps=eps, p=p, C=C,
                               w_resident=w_resident, j_axis=1)

    if w_resident:
        grid = (num_i, p)
        in_specs = [
            pl.BlockSpec((TM, C), lambda i, j: (i, 0)),            # token tile
            pl.BlockSpec((p, C, p * C), lambda i, j: (0, 0, 0)),   # full weight, resident
            pl.BlockSpec((1, C), lambda i, j: (0, 0)),             # gamma
            pl.BlockSpec((1, C), lambda i, j: (0, 0)),             # beta
        ]
        out_specs = pl.BlockSpec((RM, 1, W, p * C), lambda i, j: (i, j, 0, 0))
    else:
        # j (weight chunk) outermost, i (token tile) innermost: each chunk stays resident
        # across all token tiles, so the weight is streamed from HBM exactly once.
        grid = (p, num_i)
        in_specs = [
            pl.BlockSpec((TM, C), lambda j, i: (i, 0)),
            pl.BlockSpec((1, C, p * C), lambda j, i: (j, 0, 0)),
            pl.BlockSpec((1, C), lambda j, i: (0, 0)),
            pl.BlockSpec((1, C), lambda j, i: (0, 0)),
        ]
        out_specs = pl.BlockSpec((RM, 1, W, p * C), lambda j, i: (i, j, 0, 0))

    out4 = pl.pallas_call(
        kernel,
        out_shape=out_shape,
        grid_spec=pltpu.PrefetchScalarGridSpec(
            num_scalar_prefetch=0,
            grid=grid,
            in_specs=in_specs,
            out_specs=out_specs,
        ),
        compiler_params=pltpu.CompilerParams(
            dimension_semantics=("parallel", "parallel")),
    )(x_flat, w3, g2, b2)

    # (B*H, p1, W, p2*C) already has the rearranged memory order -> pure metadata reshape.
    return out4.reshape(B, H * p, W * p, C)


def _reference(x, expand_w, gamma, beta, patch_size=4, eps=1e-5):
    B, H, W, C = x.shape
    p = patch_size
    y = jnp.einsum("bhwc,oc->bhwo", x, expand_w)                       # Linear, no bias
    y = y.reshape(B, H, W, p, p, C).transpose(0, 1, 3, 2, 4, 5)
    y = y.reshape(B, H * p, W * p, C)
    mean = jnp.mean(y, axis=-1, keepdims=True)
    var = jnp.mean((y - mean) ** 2, axis=-1, keepdims=True)
    return (y - mean) * jax.lax.rsqrt(var + eps) * gamma + beta


if __name__ == "__main__":
    # Small shapes consistent with the module: input_resolution=(8, 8), dim=128, patch_size=4.
    B, H, W, C = 2, 8, 8, 128
    P = 4

    key = jax.random.PRNGKey(0)
    kx, kw, kg, kb = jax.random.split(key, 4)

    x = jax.random.normal(kx, (B, H, W, C), dtype=jnp.float32)
    # nn.Linear(dim, patch_size^2*dim, bias=False) weight: (out_features, in_features)
    expand_w = jax.random.normal(kw, (P * P * C, C), dtype=jnp.float32) * (C ** -0.5)
    # nn.LayerNorm(dim): gamma/beta (deterministic, perturbed from the ones/zeros default)
    gamma = 1.0 + 0.1 * jax.random.normal(kg, (C,), dtype=jnp.float32)
    beta = 0.1 * jax.random.normal(kb, (C,), dtype=jnp.float32)

    out = final_patch_expand_x4(x, expand_w, gamma, beta, patch_size=P)
    out = jax.block_until_ready(out)

    ref = _reference(x, expand_w, gamma, beta, patch_size=P)
    assert out.shape == (B, H * P, W * P, C), out.shape
    assert jnp.allclose(out, ref, atol=1e-4, rtol=1e-4), float(jnp.max(jnp.abs(out - ref)))

    print("KERNEL_OK")
</pallas_src>

<mosaic_0001>
module attributes {stable_mosaic.version = 11 : i64} {
  func.func @_expand_ln_kernel(%arg0: i32, %arg1: i32, %arg2: memref<128x128xf32, #tpu.memory_space<vmem>>, %arg3: memref<4x128x512xf32, #tpu.memory_space<vmem>>, %arg4: memref<1x128xf32, #tpu.memory_space<vmem>>, %arg5: memref<1x128xf32, #tpu.memory_space<vmem>>, %arg6: memref<16x1x8x512xf32, #tpu.memory_space<vmem>>) attributes {dimension_semantics = [#tpu.dimension_semantics<parallel>, #tpu.dimension_semantics<parallel>], iteration_bounds = array<i64: 1, 4>, scalar_prefetch = 0 : i64, scratch_operands = 0 : i64, tpu.core_type = #tpu.core_type<tc>, window_params = [{transform_indices = @transform_0, window_bounds = array<i64: 128, 128>}, {pipeline_mode = #tpu.pipeline_mode<synchronous>, transform_indices = @transform_1, window_bounds = array<i64: 4, 128, 512>}, {pipeline_mode = #tpu.pipeline_mode<synchronous>, transform_indices = @transform_2, window_bounds = array<i64: 1, 128>}, {pipeline_mode = #tpu.pipeline_mode<synchronous>, transform_indices = @transform_3, window_bounds = array<i64: 1, 128>}, {transform_indices = @transform_4, window_bounds = array<i64: 16, 1, 8, 512>}]} {
    %0 = arith.index_cast %arg1 : i32 to index
    %c0 = arith.constant 0 : index
    %c0_0 = arith.constant 0 : index
    %1 = vector.load %arg3[%0, %c0, %c0_0] : memref<4x128x512xf32, #tpu.memory_space<vmem>>, vector<1x128x512xf32>
    %2 = vector.shape_cast %1 : vector<1x128x512xf32> to vector<128x512xf32>
    %c0_1 = arith.constant 0 : index
    %c0_2 = arith.constant 0 : index
    %3 = vector.load %arg2[%c0_1, %c0_2] : memref<128x128xf32, #tpu.memory_space<vmem>>, vector<128x128xf32>
    %cst = arith.constant dense<0.000000e+00> : vector<128x512xf32>
    %4 = tpu.matmul %3, %2, %cst {dimension_numbers = #tpu.dot_dimension_numbers<[1], [0], [0], [1], [0, 0, 1, 1], [], []>} : vector<128x128xf32>, vector<128x512xf32>, vector<128x512xf32> -> vector<128x512xf32>
    %c0_3 = arith.constant 0 : index
    %c0_4 = arith.constant 0 : index
    %5 = vector.load %arg4[%c0_3, %c0_4] : memref<1x128xf32, #tpu.memory_space<vmem>>, vector<1x128xf32>
    %c0_5 = arith.constant 0 : index
    %c0_6 = arith.constant 0 : index
    %6 = vector.load %arg5[%c0_5, %c0_6] : memref<1x128xf32, #tpu.memory_space<vmem>>, vector<1x128xf32>
    %7 = vector.extract_strided_slice %4 {offsets = [0, 0], sizes = [128, 128], strides = [1, 1]} : vector<128x512xf32> to vector<128x128xf32>
    %cst_7 = arith.constant dense<0.000000e+00> : vector<128xf32>
    %8 = vector.multi_reduction <add>, %7, %cst_7 [1] : vector<128x128xf32> to vector<128xf32>
    %9 = vector.shape_cast %8 : vector<128xf32> to vector<128x1xf32>
    %cst_8 = arith.constant 7.812500e-03 : f32
    %10 = vector.broadcast %cst_8 : f32 to vector<128x1xf32>
    %11 = arith.mulf %9, %10 : vector<128x1xf32>
    %12 = arith.mulf %7, %7 : vector<128x128xf32>
    %cst_9 = arith.constant dense<0.000000e+00> : vector<128xf32>
    %13 = vector.multi_reduction <add>, %12, %cst_9 [1] : vector<128x128xf32> to vector<128xf32>
    %14 = vector.shape_cast %13 : vector<128xf32> to vector<128x1xf32>
    %cst_10 = arith.constant 7.812500e-03 : f32
    %15 = vector.broadcast %cst_10 : f32 to vector<128x1xf32>
    %16 = arith.mulf %14, %15 : vector<128x1xf32>
    %17 = arith.mulf %11, %11 : vector<128x1xf32>
    %18 = arith.subf %16, %17 : vector<128x1xf32>
    %cst_11 = arith.constant 9.99999974E-6 : f32
    %19 = vector.broadcast %cst_11 : f32 to vector<128x1xf32>
    %20 = arith.addf %18, %19 : vector<128x1xf32>
    %21 = math.rsqrt %20 : vector<128x1xf32>
    %22 = vector.broadcast %11 : vector<128x1xf32> to vector<128x128xf32>
    %23 = arith.subf %7, %22 : vector<128x128xf32>
    %24 = vector.broadcast %21 : vector<128x1xf32> to vector<128x128xf32>
    %25 = arith.mulf %23, %24 : vector<128x128xf32>
    %26 = vector.broadcast %5 : vector<1x128xf32> to vector<128x128xf32>
    %27 = arith.mulf %25, %26 : vector<128x128xf32>
    %28 = vector.broadcast %6 : vector<1x128xf32> to vector<128x128xf32>
    %29 = arith.addf %27, %28 : vector<128x128xf32>
    %30 = vector.shape_cast %29 : vector<128x128xf32> to vector<16x1x8x128xf32>
    %c0_12 = arith.constant 0 : index
    %c0_13 = arith.constant 0 : index
    %c0_14 = arith.constant 0 : index
    %c0_15 = arith.constant 0 : index
    %31 = vector.load %arg6[%c0_12, %c0_13, %c0_14, %c0_15] : memref<16x1x8x512xf32, #tpu.memory_space<vmem>>, vector<16x1x8x128xf32>
    tpu.vector_store %arg6[%c0_12, %c0_13, %c0_14, %c0_15], %30 {strides = array<i32>} : memref<16x1x8x512xf32, #tpu.memory_space<vmem>>, vector<16x1x8x128xf32>,
    %32 = vector.extract_strided_slice %4 {offsets = [0, 128], sizes = [128, 128], strides = [1, 1]} : vector<128x512xf32> to vector<128x128xf32>
    %cst_16 = arith.constant dense<0.000000e+00> : vector<128xf32>
    %33 = vector.multi_reduction <add>, %32, %cst_16 [1] : vector<128x128xf32> to vector<128xf32>
    %34 = vector.shape_cast %33 : vector<128xf32> to vector<128x1xf32>
    %cst_17 = arith.constant 7.812500e-03 : f32
    %35 = vector.broadcast %cst_17 : f32 to vector<128x1xf32>
    %36 = arith.mulf %34, %35 : vector<128x1xf32>
    %37 = arith.mulf %32, %32 : vector<128x128xf32>
    %cst_18 = arith.constant dense<0.000000e+00> : vector<128xf32>
    %38 = vector.multi_reduction <add>, %37, %cst_18 [1] : vector<128x128xf32> to vector<128xf32>
    %39 = vector.shape_cast %38 : vector<128xf32> to vector<128x1xf32>
    %cst_19 = arith.constant 7.812500e-03 : f32
    %40 = vector.broadcast %cst_19 : f32 to vector<128x1xf32>
    %41 = arith.mulf %39, %40 : vector<128x1xf32>
    %42 = arith.mulf %36, %36 : vector<128x1xf32>
    %43 = arith.subf %41, %42 : vector<128x1xf32>
    %cst_20 = arith.constant 9.99999974E-6 : f32
    %44 = vector.broadcast %cst_20 : f32 to vector<128x1xf32>
    %45 = arith.addf %43, %44 : vector<128x1xf32>
    %46 = math.rsqrt %45 : vector<128x1xf32>
    %47 = vector.broadcast %36 : vector<128x1xf32> to vector<128x128xf32>
    %48 = arith.subf %32, %47 : vector<128x128xf32>
    %49 = vector.broadcast %46 : vector<128x1xf32> to vector<128x128xf32>
    %50 = arith.mulf %48, %49 : vector<128x128xf32>
    %51 = vector.broadcast %5 : vector<1x128xf32> to vector<128x128xf32>
    %52 = arith.mulf %50, %51 : vector<128x128xf32>
    %53 = vector.broadcast %6 : vector<1x128xf32> to vector<128x128xf32>
    %54 = arith.addf %52, %53 : vector<128x128xf32>
    %55 = vector.shape_cast %54 : vector<128x128xf32> to vector<16x1x8x128xf32>
    %c0_21 = arith.constant 0 : index
    %c0_22 = arith.constant 0 : index
    %c0_23 = arith.constant 0 : index
    %c128 = arith.constant 128 : index
    %56 = vector.load %arg6[%c0_21, %c0_22, %c0_23, %c128] : memref<16x1x8x512xf32, #tpu.memory_space<vmem>>, vector<16x1x8x128xf32>
    tpu.vector_store %arg6[%c0_21, %c0_22, %c0_23, %c128], %55 {strides = array<i32>} : memref<16x1x8x512xf32, #tpu.memory_space<vmem>>, vector<16x1x8x128xf32>,
    %57 = vector.extract_strided_slice %4 {offsets = [0, 256], sizes = [128, 128], strides = [1, 1]} : vector<128x512xf32> to vector<128x128xf32>
    %cst_24 = arith.constant dense<0.000000e+00> : vector<128xf32>
    %58 = vector.multi_reduction <add>, %57, %cst_24 [1] : vector<128x128xf32> to vector<128xf32>
    %59 = vector.shape_cast %58 : vector<128xf32> to vector<128x1xf32>
    %cst_25 = arith.constant 7.812500e-03 : f32
    %60 = vector.broadcast %cst_25 : f32 to vector<128x1xf32>
    %61 = arith.mulf %59, %60 : vector<128x1xf32>
    %62 = arith.mulf %57, %57 : vector<128x128xf32>
    %cst_26 = arith.constant dense<0.000000e+00> : vector<128xf32>
    %63 = vector.multi_reduction <add>, %62, %cst_26 [1] : vector<128x128xf32> to vector<128xf32>
    %64 = vector.shape_cast %63 : vector<128xf32> to vector<128x1xf32>
    %cst_27 = arith.constant 7.812500e-03 : f32
    %65 = vector.broadcast %cst_27 : f32 to vector<128x1xf32>
    %66 = arith.mulf %64, %65 : vector<128x1xf32>
    %67 = arith.mulf %61, %61 : vector<128x1xf32>
    %68 = arith.subf %66, %67 : vector<128x1xf32>
    %cst_28 = arith.constant 9.99999974E-6 : f32
    %69 = vector.broadcast %cst_28 : f32 to vector<128x1xf32>
    %70 = arith.addf %68, %69 : vector<128x1xf32>
    %71 = math.rsqrt %70 : vector<128x1xf32>
    %72 = vector.broadcast %61 : vector<128x1xf32> to vector<128x128xf32>
    %73 = arith.subf %57, %72 : vector<128x128xf32>
    %74 = vector.broadcast %71 : vector<128x1xf32> to vector<128x128xf32>
    %75 = arith.mulf %73, %74 : vector<128x128xf32>
    %76 = vector.broadcast %5 : vector<1x128xf32> to vector<128x128xf32>
    %77 = arith.mulf %75, %76 : vector<128x128xf32>
    %78 = vector.broadcast %6 : vector<1x128xf32> to vector<128x128xf32>
    %79 = arith.addf %77, %78 : vector<128x128xf32>
    %80 = vector.shape_cast %79 : vector<128x128xf32> to vector<16x1x8x128xf32>
    %c0_29 = arith.constant 0 : index
    %c0_30 = arith.constant 0 : index
    %c0_31 = arith.constant 0 : index
    %c256 = arith.constant 256 : index
    %81 = vector.load %arg6[%c0_29, %c0_30, %c0_31, %c256] : memref<16x1x8x512xf32, #tpu.memory_space<vmem>>, vector<16x1x8x128xf32>
    tpu.vector_store %arg6[%c0_29, %c0_30, %c0_31, %c256], %80 {strides = array<i32>} : memref<16x1x8x512xf32, #tpu.memory_space<vmem>>, vector<16x1x8x128xf32>,
    %82 = vector.extract_strided_slice %4 {offsets = [0, 384], sizes = [128, 128], strides = [1, 1]} : vector<128x512xf32> to vector<128x128xf32>
    %cst_32 = arith.constant dense<0.000000e+00> : vector<128xf32>
    %83 = vector.multi_reduction <add>, %82, %cst_32 [1] : vector<128x128xf32> to vector<128xf32>
    %84 = vector.shape_cast %83 : vector<128xf32> to vector<128x1xf32>
    %cst_33 = arith.constant 7.812500e-03 : f32
    %85 = vector.broadcast %cst_33 : f32 to vector<128x1xf32>
    %86 = arith.mulf %84, %85 : vector<128x1xf32>
    %87 = arith.mulf %82, %82 : vector<128x128xf32>
    %cst_34 = arith.constant dense<0.000000e+00> : vector<128xf32>
    %88 = vector.multi_reduction <add>, %87, %cst_34 [1] : vector<128x128xf32> to vector<128xf32>
    %89 = vector.shape_cast %88 : vector<128xf32> to vector<128x1xf32>
    %cst_35 = arith.constant 7.812500e-03 : f32
    %90 = vector.broadcast %cst_35 : f32 to vector<128x1xf32>
    %91 = arith.mulf %89, %90 : vector<128x1xf32>
    %92 = arith.mulf %86, %86 : vector<128x1xf32>
    %93 = arith.subf %91, %92 : vector<128x1xf32>
    %cst_36 = arith.constant 9.99999974E-6 : f32
    %94 = vector.broadcast %cst_36 : f32 to vector<128x1xf32>
    %95 = arith.addf %93, %94 : vector<128x1xf32>
    %96 = math.rsqrt %95 : vector<128x1xf32>
    %97 = vector.broadcast %86 : vector<128x1xf32> to vector<128x128xf32>
    %98 = arith.subf %82, %97 : vector<128x128xf32>
    %99 = vector.broadcast %96 : vector<128x1xf32> to vector<128x128xf32>
    %100 = arith.mulf %98, %99 : vector<128x128xf32>
    %101 = vector.broadcast %5 : vector<1x128xf32> to vector<128x128xf32>
    %102 = arith.mulf %100, %101 : vector<128x128xf32>
    %103 = vector.broadcast %6 : vector<1x128xf32> to vector<128x128xf32>
    %104 = arith.addf %102, %103 : vector<128x128xf32>
    %105 = vector.shape_cast %104 : vector<128x128xf32> to vector<16x1x8x128xf32>
    %c0_37 = arith.constant 0 : index
    %c0_38 = arith.constant 0 : index
    %c0_39 = arith.constant 0 : index
    %c384 = arith.constant 384 : index
    %106 = vector.load %arg6[%c0_37, %c0_38, %c0_39, %c384] : memref<16x1x8x512xf32, #tpu.memory_space<vmem>>, vector<16x1x8x128xf32>
    tpu.vector_store %arg6[%c0_37, %c0_38, %c0_39, %c384], %105 {strides = array<i32>} : memref<16x1x8x512xf32, #tpu.memory_space<vmem>>, vector<16x1x8x128xf32>,
    return
  }
  func.func @transform_0(%arg0: i32, %arg1: i32) -> (i32, i32) {
    %c0_i32 = arith.constant 0 : i32
    %c0_i32_0 = arith.constant 0 : i32
    return %arg0, %c0_i32 : i32, i32
  }
  func.func @transform_1(%arg0: i32, %arg1: i32) -> (i32, i32, i32) {
    %c0_i32 = arith.constant 0 : i32
    %c0_i32_0 = arith.constant 0 : i32
    %c0_i32_1 = arith.constant 0 : i32
    %c0_i32_2 = arith.constant 0 : i32
    return %c0_i32, %c0_i32_0, %c0_i32_1 : i32, i32, i32
  }
  func.func @transform_2(%arg0: i32, %arg1: i32) -> (i32, i32) {
    %c0_i32 = arith.constant 0 : i32
    %c0_i32_0 = arith.constant 0 : i32
    %c0_i32_1 = arith.constant 0 : i32
    return %c0_i32, %c0_i32_0 : i32, i32
  }
  func.func @transform_3(%arg0: i32, %arg1: i32) -> (i32, i32) {
    %c0_i32 = arith.constant 0 : i32
    %c0_i32_0 = arith.constant 0 : i32
    %c0_i32_1 = arith.constant 0 : i32
    return %c0_i32, %c0_i32_0 : i32, i32
  }
  func.func @transform_4(%arg0: i32, %arg1: i32) -> (i32, i32, i32, i32) {
    %c0_i32 = arith.constant 0 : i32
    %c0_i32_0 = arith.constant 0 : i32
    %c0_i32_1 = arith.constant 0 : i32
    return %arg0, %arg1, %c0_i32, %c0_i32_0 : i32, i32, i32, i32
  }
}

</mosaic_0001>

<llo_original>
// kernel: tpu_custom_call.1
$region0: #{tpu_custom_call.1}
  #allocation0 [shape = 'u32[]', space=smem, size = 0x4, offset = 0x4, fixed_abs, tag = 'smem constant byte address 0x4 - core index']
  #allocation1 [shape = 'u32[144,128]{1,0:T(1,128)}', space=vmem, size = 0x12000, scoped, tag = 'internal scratch']
  %s0 = inlined_call_operand.hbm [shape: f32[128,128], index: 0, kind: input, shape index: {}]
  %s1 = inlined_call_operand.hbm [shape: f32[4,128,512], index: 1, kind: input, shape index: {}]
  %s2 = inlined_call_operand.vmem [shape: f32[1,128], index: 2, kind: input, shape index: {}]
  %s3 = inlined_call_operand.vmem [shape: f32[1,128], index: 3, kind: input, shape index: {}]
  %s4 = inlined_call_operand.hbm [shape: f32[16,4,8,512], index: 4, kind: output, shape index: {}]
  %s5 = sld [smem:[#allocation0]]
  $region57: #{tpu_custom_call.1} parent=0
    _
  %s7 = ssub.s32 1, %s5
  %s8 = scalar_select 0, %s7, %s5
  $region1: #{tpu_custom_call.1} parent=0
    #allocation2 [shape = 'u8[65536]{0}', space=vmem, size = 0x10000, scoped, tag = 'input window, operand 0, single buffered']
    #allocation3 [shape = 's32[2]{0}', space=sflag, size = 0x8, scoped, tag = 'scoped memory for tpu_custom_call.1']
    #allocation4 [shape = 's32[2]{0}', space=sflag, size = 0x8, scoped, tag = 'scoped memory for tpu_custom_call.1']
    #allocation5 [shape = 'u8[1048576]{0}', space=vmem, size = 0x100000, scoped, tag = 'input window, operand 1, single buffered']
    #allocation6 [shape = 's32[1]{0}', space=sflag, size = 0x4, scoped, tag = 'scoped memory for tpu_custom_call.1']
    #allocation7 [shape = 'u8[524288]{0}', space=vmem, size = 0x80000, scoped, tag = 'output window, operand 0']
    %9 = vsyncpa [#allocation3], 0
    %10 = vsyncpa [#allocation6], 0
    %11 = vsyncpa [#allocation4], 0
    %s12 = scalar_lea.sflag [#allocation4], 1
    %13 = vsyncpa %s12, 0
    loop: start=0, step=1, limit=6
    $region2: #{tpu_custom_call.1} parent=1 // loop_pre_header
      _
    $region3: #{tpu_custom_call.1} parent=1 // loop_header
      %s15 = sphi 0, %s19
      %p16 = scmp.ge.s32.totalorder %s15, 6
      %s22 = sphi 0, %s34
      %s23 = sphi 0, %s30
      %s24 = sphi 0, %s22
      %s25 = sphi 0, %s23
      %s26 = sphi 0, %s24
      %s27 = sphi 0, %s25
      %s37 = sphi 0, %s39
      %s40 = sphi 0, %s37
      %s41 = sphi 0, %s40
      %s57 = sphi 0, %s41
      %s61 = sphi 0, %s61
      %s63 = sphi 0, %s61
      %s64 = sphi 0, %s63
      %s78 = sphi 0, %s64
      %s82 = sphi 0, %s82
      %s84 = sphi 0, %s82
      %s85 = sphi 0, %s84
      %s99 = sphi 0, %s85
      %s103 = sphi 0, %s103
      %s105 = sphi 0, %s103
      %s106 = sphi 0, %s105
      %s120 = sphi 0, %s106
      %s128 = sphi 0, %s130
      %s131 = sphi 0, %s128
      %s132 = sphi 0, %s131
      %s148 = sphi 0, %s132
    $region4: #{tpu_custom_call.1} parent=1 // loop_header_branch
      %18 = sbr.rel (%p16) target = $region8
    $region5: #{tpu_custom_call.1} parent=1 // loop_body
      %s20 = ssub.s32 %s15, 1
      %s21 = ssub.s32 %s15, 2
      %s28 = sadd.s32 1, %s23
      %p29 = scmp.ge.s32.totalorder %s28, 4
      %s30 = scalar_select %p29, 0, %s28
      %s31 = sadd.s32 1, %s22
      %s32 = scalar_select %p29, %s31, %s22
      %p33 = scmp.ge.s32.totalorder %s32, 1
      %s34 = scalar_select %p33, 0, %s32
      %s35 = ssub.s32 %s22, %s34
      %p36 = scmp.eq.s32.totalorder %s35, 0
      %s38 = sadd.s32 %s37, 1
      %s39 = scalar_select %p36, %s37, %s38
      %p42 = pneg %p36
      %p43 = scmp.eq.s32.totalorder %s15, 3
      %p44 = por %p42, %p43
      %p45 = scmp.ne.s32.totalorder %s37, %s40
      %p46 = scmp.eq.s32.totalorder %s15, 0
      %p47 = por %p45, %p46
      %p48 = scmp.ne.s32.totalorder %s37, %s40
      %p49 = scmp.eq.s32.totalorder %s20, 3
      %p50 = por %p48, %p49
      %p51 = scmp.ne.s32.totalorder %s40, %s41
      %p52 = scmp.eq.s32.totalorder %s20, 0
      %p53 = por %p51, %p52
      %p54 = scmp.ne.s32.totalorder %s40, %s41
      %p55 = scmp.eq.s32.totalorder %s21, 3
      %p56 = por %p54, %p55
      %p58 = scmp.ne.s32.totalorder %s41, %s57
      %p59 = scmp.eq.s32.totalorder %s21, 0
      %p60 = por %p58, %p59
      %s62 = sadd.s32 %s61, 1
      %p65 = scmp.eq.s32.totalorder %s15, 3
      %p66 = scmp.ne.s32.totalorder %s61, %s63
      %p67 = scmp.eq.s32.totalorder %s15, 0
      %p68 = por %p66, %p67
      %p69 = scmp.ne.s32.totalorder %s61, %s63
      %p70 = scmp.eq.s32.totalorder %s20, 3
      %p71 = por %p69, %p70
      %p72 = scmp.ne.s32.totalorder %s63, %s64
      %p73 = scmp.eq.s32.totalorder %s20, 0
      %p74 = por %p72, %p73
      %p75 = scmp.ne.s32.totalorder %s63, %s64
      %p76 = scmp.eq.s32.totalorder %s21, 3
      %p77 = por %p75, %p76
      %p79 = scmp.ne.s32.totalorder %s64, %s78
      %p80 = scmp.eq.s32.totalorder %s21, 0
      %p81 = por %p79, %p80
      %s83 = sadd.s32 %s82, 1
      %p86 = scmp.eq.s32.totalorder %s15, 3
      %p87 = scmp.ne.s32.totalorder %s82, %s84
      %p88 = scmp.eq.s32.totalorder %s15, 0
      %p89 = por %p87, %p88
      %p90 = scmp.ne.s32.totalorder %s82, %s84
      %p91 = scmp.eq.s32.totalorder %s20, 3
      %p92 = por %p90, %p91
      %p93 = scmp.ne.s32.totalorder %s84, %s85
      %p94 = scmp.eq.s32.totalorder %s20, 0
      %p95 = por %p93, %p94
      %p96 = scmp.ne.s32.totalorder %s84, %s85
      %p97 = scmp.eq.s32.totalorder %s21, 3
      %p98 = por %p96, %p97
      %p100 = scmp.ne.s32.totalorder %s85, %s99
      %p101 = scmp.eq.s32.totalorder %s21, 0
      %p102 = por %p100, %p101
      %s104 = sadd.s32 %s103, 1
      %p107 = scmp.eq.s32.totalorder %s15, 3
      %p108 = scmp.ne.s32.totalorder %s103, %s105
      %p109 = scmp.eq.s32.totalorder %s15, 0
      %p110 = por %p108, %p109
      %p111 = scmp.ne.s32.totalorder %s103, %s105
      %p112 = scmp.eq.s32.totalorder %s20, 3
      %p113 = por %p111, %p112
      %p114 = scmp.ne.s32.totalorder %s105, %s106
      %p115 = scmp.eq.s32.totalorder %s20, 0
      %p116 = por %p114, %p115
      %p117 = scmp.ne.s32.totalorder %s105, %s106
      %p118 = scmp.eq.s32.totalorder %s21, 3
      %p119 = por %p117, %p118
      %p121 = scmp.ne.s32.totalorder %s106, %s120
      %p122 = scmp.eq.s32.totalorder %s21, 0
      %p123 = por %p121, %p122
      %s124 = ssub.s32 %s22, %s34
      %s125 = ssub.s32 %s23, %s30
      %s126 = sor.u32 %s124, %s125
      %p127 = scmp.eq.s32.totalorder %s126, 0
      %s129 = sadd.s32 %s128, 1
      %s130 = scalar_select %p127, %s128, %s129
      %p133 = pneg %p127
      %p134 = scmp.eq.s32.totalorder %s15, 3
      %p135 = por %p133, %p134
      %p136 = scmp.ne.s32.totalorder %s128, %s131
      %p137 = scmp.eq.s32.totalorder %s15, 0
      %p138 = por %p136, %p137
      %p139 = scmp.ne.s32.totalorder %s128, %s131
      %p140 = scmp.eq.s32.totalorder %s20, 3
      %p141 = por %p139, %p140
      %p142 = scmp.ne.s32.totalorder %s131, %s132
      %p143 = scmp.eq.s32.totalorder %s20, 0
      %p144 = por %p142, %p143
      %p145 = scmp.ne.s32.totalorder %s131, %s132
      %p146 = scmp.eq.s32.totalorder %s21, 3
      %p147 = por %p145, %p146
      %p149 = scmp.ne.s32.totalorder %s132, %s148
      %p150 = scmp.eq.s32.totalorder %s21, 0
      %p151 = por %p149, %p150
      %p152 = scmp.le.s32.totalorder 1, %s15
      %p153 = scmp.lt.s32.totalorder %s15, 5
      %p154 = pnand %p152, %p153
      %p155 = pneg %p154
      // Predicated region
      $region9: #{tpu_custom_call.1} parent=5 // pred_check
        _
      $region10: #{tpu_custom_call.1} parent=5 // pred_check_branch
        %157 = sbr.rel (%p154) target = $region12
      $region11: #{tpu_custom_call.1} parent=5 // pred_region
        %s158 = ssub.s32 %s15, 1
        // Predicated region
        $region13: #{tpu_custom_call.1} parent=11 // pred_check
          %p159 = pneg %p53
        $region14: #{tpu_custom_call.1} parent=11 // pred_check_branch
          %161 = sbr.rel (%p159) target = $region16
        $region15: #{tpu_custom_call.1} parent=11 // pred_region
          %s162 = smul.u32 16, %s24
          %s164 = ssub.s32 2048, 2048
          %165 = vsyncadd [#allocation3], %s164
          %s166 = smul.addr %s162, 128
          %s167 = scalar_lea.hbm %s0, %s166
          %s168 = sshll.u32 [#allocation2], 4
          %s169 = int_to_ptr.vmem [resolvable:$true] %s168
          %174 = dma.hbm_to_vmem [thread:$0]  %s167, 2048, %s169, [#allocation3], 128, 128, 8
        $region16: #{tpu_custom_call.1} parent=11 // pred_fallthru
          _
        // Predicated region
        $region17: #{tpu_custom_call.1} parent=11 // pred_check
          %p175 = pneg %p74
        $region18: #{tpu_custom_call.1} parent=11 // pred_check_branch
          %177 = sbr.rel (%p175) target = $region20
        $region19: #{tpu_custom_call.1} parent=11 // pred_region
          %s179 = ssub.s32 32768, 32768
          %180 = vsyncadd [#allocation6], %s179
          %s181 = sshll.u32 [#allocation5], 4
          %s182 = int_to_ptr.vmem [resolvable:$true] %s181
          %187 = dma.hbm_to_vmem [thread:$0]  %s1, 32768, %s182, [#allocation6], 512, 512, 32
        $region20: #{tpu_custom_call.1} parent=11 // pred_fallthru
          _
        // Predicated region
        $region21: #{tpu_custom_call.1} parent=11 // pred_check
          %p188 = pneg %p95
        $region22: #{tpu_custom_call.1} parent=11 // pred_check_branch
          %190 = sbr.rel (%p188) target = $region24
        $region23: #{tpu_custom_call.1} parent=11 // pred_region
          _
        $region24: #{tpu_custom_call.1} parent=11 // pred_fallthru
          _
        // Predicated region
        $region25: #{tpu_custom_call.1} parent=11 // pred_check
          %p191 = pneg %p116
        $region26: #{tpu_custom_call.1} parent=11 // pred_check_branch
          %193 = sbr.rel (%p191) target = $region28
        $region27: #{tpu_custom_call.1} parent=11 // pred_region
          _
        $region28: #{tpu_custom_call.1} parent=11 // pred_fallthru
          _
      $region12: #{tpu_custom_call.1} parent=5 // pred_fallthru
        _
      %p194 = scmp.lt.s32.totalorder %s15, 4
      // Predicated region
      $region29: #{tpu_custom_call.1} parent=5 // pred_check
        %p195 = pneg %p194
      $region30: #{tpu_custom_call.1} parent=5 // pred_check_branch
        %197 = sbr.rel (%p195) target = $region32
      $region31: #{tpu_custom_call.1} parent=5 // pred_region
        _
      $region32: #{tpu_custom_call.1} parent=5 // pred_fallthru
        _
      %p198 = scmp.le.s32.totalorder 1, %s15
      %p199 = scmp.lt.s32.totalorder %s15, 5
      %p200 = pnand %p198, %p199
      %p201 = pneg %p200
      // Predicated region
      $region33: #{tpu_custom_call.1} parent=5 // pred_check
        _
      $region34: #{tpu_custom_call.1} parent=5 // pred_check_branch
        %203 = sbr.rel (%p200) target = $region36
      $region35: #{tpu_custom_call.1} parent=5 // pred_region
        %s204 = ssub.s32 %s15, 1
        // Predicated region
        $region37: #{tpu_custom_call.1} parent=35 // pred_check
          %p205 = pneg %p53
        $region38: #{tpu_custom_call.1} parent=35 // pred_check_branch
          %207 = sbr.rel (%p205) target = $region40
        $region39: #{tpu_custom_call.1} parent=35 // pred_region
          %208 = dma.done [#allocation3], 2048
        $region40: #{tpu_custom_call.1} parent=35 // pred_fallthru
          _
        // Predicated region
        $region41: #{tpu_custom_call.1} parent=35 // pred_check
          %p209 = pneg %p74
        $region42: #{tpu_custom_call.1} parent=35 // pred_check_branch
          %211 = sbr.rel (%p209) target = $region44
        $region43: #{tpu_custom_call.1} parent=35 // pred_region
          %212 = dma.done [#allocation6], 32768
        $region44: #{tpu_custom_call.1} parent=35 // pred_fallthru
          _
        %p213 = pneg %p53
        %p214 = pneg %p50
        %p215 = pneg %p74
        %p216 = pneg %p71
        %p217 = pneg %p95
        %p218 = pneg %p92
        %p219 = pneg %p116
        %p220 = pneg %p113
        %p221 = pneg %p144
        %p222 = pneg %p141
        %s223 = sand.u32 %s131, 1
        %s224 = scalar_lea.sflag [#allocation4], %s223
        %s225 = sand.u32 %s131, 1
        %s226 = smul.addr %s225, 512
        %s227 = scalar_lea.vmem [#allocation7], %s226
        %s228 = smul.u32 16, %s24
        %s229 = smul.u32 16, %s24
        %s230 = smul.u32 %s25, 64
        %s231 = smul.addr %s230, 8
        %s232 = scalar_lea.vmem [#allocation5], %s231
        %v233 = vld [vmem:[%s232] sm:$0xff]
        %v234 = vld [vmem:[%s232 + $0x8] sm:$0xff]
        %v235 = vld [vmem:[%s232 + $0x10] sm:$0xff]
        %v236 = vld [vmem:[%s232 + $0x18] sm:$0xff]
        %v237 = vld [vmem:[%s232 + $0x20] sm:$0xff]
        %v238 = vld [vmem:[%s232 + $0x28] sm:$0xff]
        %v239 = vld [vmem:[%s232 + $0x30] sm:$0xff]
        %v240 = vld [vmem:[%s232 + $0x38] sm:$0xff]
        %v241 = vld [vmem:[%s232 + $0x40] sm:$0xff]
        %v242 = vld [vmem:[%s232 + $0x48] sm:$0xff]
        %v243 = vld [vmem:[%s232 + $0x50] sm:$0xff]
        %v244 = vld [vmem:[%s232 + $0x58] sm:$0xff]
        %v245 = vld [vmem:[%s232 + $0x60] sm:$0xff]
        %v246 = vld [vmem:[%s232 + $0x68] sm:$0xff]
        %v247 = vld [vmem:[%s232 + $0x70] sm:$0xff]
        %v248 = vld [vmem:[%s232 + $0x78] sm:$0xff]
        %v249 = vld [vmem:[%s232 + $0x80] sm:$0xff]
        %v250 = vld [vmem:[%s232 + $0x88] sm:$0xff]
        %v251 = vld [vmem:[%s232 + $0x90] sm:$0xff]
        %v252 = vld [vmem:[%s232 + $0x98] sm:$0xff]
        %v253 = vld [vmem:[%s232 + $0xa0] sm:$0xff]
        %v254 = vld [vmem:[%s232 + $0xa8] sm:$0xff]
        %v255 = vld [vmem:[%s232 + $0xb0] sm:$0xff]
        %v256 = vld [vmem:[%s232 + $0xb8] sm:$0xff]
        %v257 = vld [vmem:[%s232 + $0xc0] sm:$0xff]
        %v258 = vld [vmem:[%s232 + $0xc8] sm:$0xff]
        %v259 = vld [vmem:[%s232 + $0xd0] sm:$0xff]
        %v260 = vld [vmem:[%s232 + $0xd8] sm:$0xff]
        %v261 = vld [vmem:[%s232 + $0xe0] sm:$0xff]
        %v262 = vld [vmem:[%s232 + $0xe8] sm:$0xff]
        %v263 = vld [vmem:[%s232 + $0xf0] sm:$0xff]
        %v264 = vld [vmem:[%s232 + $0xf8] sm:$0xff]
        %v265 = vld [vmem:[%s232 + $0x100] sm:$0xff]
        %v266 = vld [vmem:[%s232 + $0x108] sm:$0xff]
        %v267 = vld [vmem:[%s232 + $0x110] sm:$0xff]
        %v268 = vld [vmem:[%s232 + $0x118] sm:$0xff]
        %v269 = vld [vmem:[%s232 + $0x120] sm:$0xff]
        %v270 = vld [vmem:[%s232 + $0x128] sm:$0xff]
        %v271 = vld [vmem:[%s232 + $0x130] sm:$0xff]
        %v272 = vld [vmem:[%s232 + $0x138] sm:$0xff]
        %v273 = vld [vmem:[%s232 + $0x140] sm:$0xff]
        %v274 = vld [vmem:[%s232 + $0x148] sm:$0xff]
        %v275 = vld [vmem:[%s232 + $0x150] sm:$0xff]
        %v276 = vld [vmem:[%s232 + $0x158] sm:$0xff]
        %v277 = vld [vmem:[%s232 + $0x160] sm:$0xff]
        %v278 = vld [vmem:[%s232 + $0x168] sm:$0xff]
        %v279 = vld [vmem:[%s232 + $0x170] sm:$0xff]
        %v280 = vld [vmem:[%s232 + $0x178] sm:$0xff]
        %v281 = vld [vmem:[%s232 + $0x180] sm:$0xff]
        %v282 = vld [vmem:[%s232 + $0x188] sm:$0xff]
        %v283 = vld [vmem:[%s232 + $0x190] sm:$0xff]
        %v284 = vld [vmem:[%s232 + $0x198] sm:$0xff]
        %v285 = vld [vmem:[%s232 + $0x1a0] sm:$0xff]
        %v286 = vld [vmem:[%s232 + $0x1a8] sm:$0xff]
        %v287 = vld [vmem:[%s232 + $0x1b0] sm:$0xff]
        %v288 = vld [vmem:[%s232 + $0x1b8] sm:$0xff]
        %v289 = vld [vmem:[%s232 + $0x1c0] sm:$0xff]
        %v290 = vld [vmem:[%s232 + $0x1c8] sm:$0xff]
        %v291 = vld [vmem:[%s232 + $0x1d0] sm:$0xff]
        %v292 = vld [vmem:[%s232 + $0x1d8] sm:$0xff]
        %v293 = vld [vmem:[%s232 + $0x1e0] sm:$0xff]
        %v294 = vld [vmem:[%s232 + $0x1e8] sm:$0xff]
        %v295 = vld [vmem:[%s232 + $0x1f0] sm:$0xff]
        %v296 = vld [vmem:[%s232 + $0x1f8] sm:$0xff]
        %v297 = vld [vmem:[#allocation2] sm:$0xff]
        %v298 = vld [vmem:[#allocation2 + $0x8] sm:$0xff]
        %v299 = vld [vmem:[#allocation2 + $0x10] sm:$0xff]
        %v300 = vld [vmem:[#allocation2 + $0x18] sm:$0xff]
        %v301 = vld [vmem:[#allocation2 + $0x20] sm:$0xff]
        %v302 = vld [vmem:[#allocation2 + $0x28] sm:$0xff]
        %v303 = vld [vmem:[#allocation2 + $0x30] sm:$0xff]
        %v304 = vld [vmem:[#allocation2 + $0x38] sm:$0xff]
        %v305 = vld [vmem:[#allocation2 + $0x40] sm:$0xff]
        %v306 = vld [vmem:[#allocation2 + $0x48] sm:$0xff]
        %v307 = vld [vmem:[#allocation2 + $0x50] sm:$0xff]
        %v308 = vld [vmem:[#allocation2 + $0x58] sm:$0xff]
        %v309 = vld [vmem:[#allocation2 + $0x60] sm:$0xff]
        %v310 = vld [vmem:[#allocation2 + $0x68] sm:$0xff]
        %v311 = vld [vmem:[#allocation2 + $0x70] sm:$0xff]
        %v312 = vld [vmem:[#allocation2 + $0x78] sm:$0xff]
        %313 = vmatprep.subr.mxu0 %v294
        %314 = vmatpush1.msra.mxu0 %v293
        %315 = vmatprep.subr.mxu0 %v290
        %316 = vmatpush1.msra.mxu0 %v289
        %317 = vmatprep.subr.mxu0 %v286
        %318 = vmatpush1.msra.mxu0 %v285
        %319 = vmatprep.subr.mxu0 %v282
        %320 = vmatpush1.msra.mxu0 %v281
        %321 = vmatprep.subr.mxu0 %v278
        %322 = vmatpush1.msra.mxu0 %v277
        %323 = vmatprep.subr.mxu0 %v274
        %324 = vmatpush1.msra.mxu0 %v273
        %325 = vmatprep.subr.mxu0 %v270
        %326 = vmatpush1.msra.mxu0 %v269
        %327 = vmatprep.subr.mxu0 %v266
        %328 = vmatpush1.msra.mxu0 %v265
        %329 = vmatprep.subr.mxu0 %v262
        %330 = vmatpush1.msra.mxu0 %v261
        %331 = vmatprep.subr.mxu0 %v258
        %332 = vmatpush1.msra.mxu0 %v257
        %333 = vmatprep.subr.mxu0 %v254
        %334 = vmatpush1.msra.mxu0 %v253
        %335 = vmatprep.subr.mxu0 %v250
        %336 = vmatpush1.msra.mxu0 %v249
        %337 = vmatprep.subr.mxu0 %v246
        %338 = vmatpush1.msra.mxu0 %v245
        %339 = vmatprep.subr.mxu0 %v242
        %340 = vmatpush1.msra.mxu0 %v241
        %341 = vmatprep.subr.mxu0 %v238
        %342 = vmatpush1.msra.mxu0 %v237
        %343 = vmatprep.subr.mxu0 %v234
        %344 = vmatpush1.msra.mxu0 %v233
        %345 = vmatprep.subr.mxu0 0.0
        %346 = vmatpush2.msra.mxu0 0.0
        %347 = vmatprep.subr.mxu0 0.0
        %348 = vmatpush2.msra.mxu0 0.0
        %349 = vmatprep.subr.mxu0 0.0
        %350 = vmatpush2.msra.mxu0 0.0
        %351 = vmatprep.subr.mxu0 0.0
        %352 = vmatpush2.msra.mxu0 0.0
        %353 = vmatprep.subr.mxu0 0.0
        %354 = vmatpush2.msra.mxu0 0.0
        %355 = vmatprep.subr.mxu0 0.0
        %356 = vmatpush2.msra.mxu0 0.0
        %357 = vmatprep.subr.mxu0 0.0
        %358 = vmatpush2.msra.mxu0 0.0
        %359 = vmatprep.subr.mxu0 0.0
        %360 = vmatpush2.msra.mxu0 0.0
        %361 = vmatprep.subr.mxu0 0.0
        %362 = vmatpush2.msra.mxu0 0.0
        %363 = vmatprep.subr.mxu0 0.0
        %364 = vmatpush2.msra.mxu0 0.0
        %365 = vmatprep.subr.mxu0 0.0
        %366 = vmatpush2.msra.mxu0 0.0
        %367 = vmatprep.subr.mxu0 0.0
        %368 = vmatpush2.msra.mxu0 0.0
        %369 = vmatprep.subr.mxu0 0.0
        %370 = vmatpush2.msra.mxu0 0.0
        %371 = vmatprep.subr.mxu0 0.0
        %372 = vmatpush2.msra.mxu0 0.0
        %373 = vmatprep.subr.mxu0 0.0
        %374 = vmatpush2.msra.mxu0 0.0
        %375 = vmatprep.subr.mxu0 0.0
        %376 = vmatpush2.msra.mxu0 0.0
        %377 = vmatprep.mubr.f32.mxu0 0.0
        %378 = vmatmul.mubr.f32.gmra.mxu0 %v297
        %v379 = vpop.f32.mrf.mxu0
        %v380 = vadd.f32 0.0, %v379
        %v381 = vpop.f32.mrf.mxu0
        %v382 = vadd.f32 0.0, %v381
        %383 = vmatprep.mubr.f32.mxu0 0.0
        %384 = vmatmul.mubr.f32.gmra.mxu0 %v298
        %v385 = vpop.f32.mrf.mxu0
        %v386 = vadd.f32 0.0, %v385
        %v387 = vpop.f32.mrf.mxu0
        %v388 = vadd.f32 0.0, %v387
        %389 = vmatprep.mubr.f32.mxu0 0.0
        %390 = vmatmul.mubr.f32.gmra.mxu0 %v299
        %v391 = vpop.f32.mrf.mxu0
        %v392 = vadd.f32 0.0, %v391
        %v393 = vpop.f32.mrf.mxu0
        %v394 = vadd.f32 0.0, %v393
        %395 = vmatprep.mubr.f32.mxu0 0.0
        %396 = vmatmul.mubr.f32.gmra.mxu0 %v300
        %v397 = vpop.f32.mrf.mxu0
        %v398 = vadd.f32 0.0, %v397
        %v399 = vpop.f32.mrf.mxu0
        %v400 = vadd.f32 0.0, %v399
        %401 = vmatprep.mubr.f32.mxu0 0.0
        %402 = vmatmul.mubr.f32.gmra.mxu0 %v301
        %v403 = vpop.f32.mrf.mxu0
        %v404 = vadd.f32 0.0, %v403
        %v405 = vpop.f32.mrf.mxu0
        %v406 = vadd.f32 0.0, %v405
        %407 = vmatprep.mubr.f32.mxu0 0.0
        %408 = vmatmul.mubr.f32.gmra.mxu0 %v302
        %v409 = vpop.f32.mrf.mxu0
        %v410 = vadd.f32 0.0, %v409
        %v411 = vpop.f32.mrf.mxu0
        %v412 = vadd.f32 0.0, %v411
        %413 = vmatprep.mubr.f32.mxu0 0.0
        %414 = vmatmul.mubr.f32.gmra.mxu0 %v303
        %v415 = vpop.f32.mrf.mxu0
        %v416 = vadd.f32 0.0, %v415
        %v417 = vpop.f32.mrf.mxu0
        %v418 = vadd.f32 0.0, %v417
        %419 = vmatprep.mubr.f32.mxu0 0.0
        %420 = vmatmul.mubr.f32.gmra.mxu0 %v304
        %v421 = vpop.f32.mrf.mxu0
        %v422 = vadd.f32 0.0, %v421
        %v423 = vpop.f32.mrf.mxu0
        %v424 = vadd.f32 0.0, %v423
        %425 = vmatprep.mubr.f32.mxu0 0.0
        %426 = vmatmul.mubr.f32.gmra.mxu0 %v305
        %v427 = vpop.f32.mrf.mxu0
        %v428 = vadd.f32 0.0, %v427
        %v429 = vpop.f32.mrf.mxu0
        %v430 = vadd.f32 0.0, %v429
        %431 = vmatprep.mubr.f32.mxu0 0.0
        %432 = vmatmul.mubr.f32.gmra.mxu0 %v306
        %v433 = vpop.f32.mrf.mxu0
        %v434 = vadd.f32 0.0, %v433
        %v435 = vpop.f32.mrf.mxu0
        %v436 = vadd.f32 0.0, %v435
        %437 = vmatprep.mubr.f32.mxu0 0.0
        %438 = vmatmul.mubr.f32.gmra.mxu0 %v307
        %v439 = vpop.f32.mrf.mxu0
        %v440 = vadd.f32 0.0, %v439
        %v441 = vpop.f32.mrf.mxu0
        %v442 = vadd.f32 0.0, %v441
        %443 = vmatprep.mubr.f32.mxu0 0.0
        %444 = vmatmul.mubr.f32.gmra.mxu0 %v308
        %v445 = vpop.f32.mrf.mxu0
        %v446 = vadd.f32 0.0, %v445
        %v447 = vpop.f32.mrf.mxu0
        %v448 = vadd.f32 0.0, %v447
        %449 = vmatprep.mubr.f32.mxu0 0.0
        %450 = vmatmul.mubr.f32.gmra.mxu0 %v309
        %v451 = vpop.f32.mrf.mxu0
        %v452 = vadd.f32 0.0, %v451
        %v453 = vpop.f32.mrf.mxu0
        %v454 = vadd.f32 0.0, %v453
        %455 = vmatprep.mubr.f32.mxu0 0.0
        %456 = vmatmul.mubr.f32.gmra.mxu0 %v310
        %v457 = vpop.f32.mrf.mxu0
        %v458 = vadd.f32 0.0, %v457
        %v459 = vpop.f32.mrf.mxu0
        %v460 = vadd.f32 0.0, %v459
        %461 = vmatprep.mubr.f32.mxu0 0.0
        %462 = vmatmul.mubr.f32.gmra.mxu0 %v311
        %v463 = vpop.f32.mrf.mxu0
        %v464 = vadd.f32 0.0, %v463
        %v465 = vpop.f32.mrf.mxu0
        %v466 = vadd.f32 0.0, %v465
        %467 = vmatprep.mubr.f32.mxu0 0.0
        %468 = vmatmul.mubr.f32.gmra.mxu0 %v312
        %v469 = vpop.f32.mrf.mxu0
        %v470 = vadd.f32 0.0, %v469
        %v471 = vpop.f32.mrf.mxu0
        %v472 = vadd.f32 0.0, %v471
        %473 = vdwg.mxu0
        %474 = vmatprep.subr.mxu0 %v296
        %475 = vmatpush1.msra.mxu0 %v295
        %476 = vmatprep.subr.mxu0 %v292
        %477 = vmatpush1.msra.mxu0 %v291
        %478 = vmatprep.subr.mxu0 %v288
        %479 = vmatpush1.msra.mxu0 %v287
        %480 = vmatprep.subr.mxu0 %v284
        %481 = vmatpush1.msra.mxu0 %v283
        %482 = vmatprep.subr.mxu0 %v280
        %483 = vmatpush1.msra.mxu0 %v279
        %484 = vmatprep.subr.mxu0 %v276
        %485 = vmatpush1.msra.mxu0 %v275
        %486 = vmatprep.subr.mxu0 %v272
        %487 = vmatpush1.msra.mxu0 %v271
        %488 = vmatprep.subr.mxu0 %v268
        %489 = vmatpush1.msra.mxu0 %v267
        %490 = vmatprep.subr.mxu0 %v264
        %491 = vmatpush1.msra.mxu0 %v263
        %492 = vmatprep.subr.mxu0 %v260
        %493 = vmatpush1.msra.mxu0 %v259
        %494 = vmatprep.subr.mxu0 %v256
        %495 = vmatpush1.msra.mxu0 %v255
        %496 = vmatprep.subr.mxu0 %v252
        %497 = vmatpush1.msra.mxu0 %v251
        %498 = vmatprep.subr.mxu0 %v248
        %499 = vmatpush1.msra.mxu0 %v247
        %500 = vmatprep.subr.mxu0 %v244
        %501 = vmatpush1.msra.mxu0 %v243
        %502 = vmatprep.subr.mxu0 %v240
        %503 = vmatpush1.msra.mxu0 %v239
        %504 = vmatprep.subr.mxu0 %v236
        %505 = vmatpush1.msra.mxu0 %v235
        %506 = vmatprep.subr.mxu0 0.0
        %507 = vmatpush2.msra.mxu0 0.0
        %508 = vmatprep.subr.mxu0 0.0
        %509 = vmatpush2.msra.mxu0 0.0
        %510 = vmatprep.subr.mxu0 0.0
        %511 = vmatpush2.msra.mxu0 0.0
        %512 = vmatprep.subr.mxu0 0.0
        %513 = vmatpush2.msra.mxu0 0.0
        %514 = vmatprep.subr.mxu0 0.0
        %515 = vmatpush2.msra.mxu0 0.0
        %516 = vmatprep.subr.mxu0 0.0
        %517 = vmatpush2.msra.mxu0 0.0
        %518 = vmatprep.subr.mxu0 0.0
        %519 = vmatpush2.msra.mxu0 0.0
        %520 = vmatprep.subr.mxu0 0.0
        %521 = vmatpush2.msra.mxu0 0.0
        %522 = vmatprep.subr.mxu0 0.0
        %523 = vmatpush2.msra.mxu0 0.0
        %524 = vmatprep.subr.mxu0 0.0
        %525 = vmatpush2.msra.mxu0 0.0
        %526 = vmatprep.subr.mxu0 0.0
        %527 = vmatpush2.msra.mxu0 0.0
        %528 = vmatprep.subr.mxu0 0.0
        %529 = vmatpush2.msra.mxu0 0.0
        %530 = vmatprep.subr.mxu0 0.0
        %531 = vmatpush2.msra.mxu0 0.0
        %532 = vmatprep.subr.mxu0 0.0
        %533 = vmatpush2.msra.mxu0 0.0
        %534 = vmatprep.subr.mxu0 0.0
        %535 = vmatpush2.msra.mxu0 0.0
        %536 = vmatprep.subr.mxu0 0.0
        %537 = vmatpush2.msra.mxu0 0.0
        %538 = vmatprep.mubr.f32.mxu0 0.0
        %539 = vmatmul.mubr.f32.gmra.mxu0 %v297
        %v540 = vpop.f32.mrf.mxu0
        %v541 = vadd.f32 0.0, %v540
        %v542 = vpop.f32.mrf.mxu0
        %v543 = vadd.f32 0.0, %v542
        %544 = vmatprep.mubr.f32.mxu0 0.0
        %545 = vmatmul.mubr.f32.gmra.mxu0 %v298
        %v546 = vpop.f32.mrf.mxu0
        %v547 = vadd.f32 0.0, %v546
        %v548 = vpop.f32.mrf.mxu0
        %v549 = vadd.f32 0.0, %v548
        %550 = vmatprep.mubr.f32.mxu0 0.0
        %551 = vmatmul.mubr.f32.gmra.mxu0 %v299
        %v552 = vpop.f32.mrf.mxu0
        %v553 = vadd.f32 0.0, %v552
        %v554 = vpop.f32.mrf.mxu0
        %v555 = vadd.f32 0.0, %v554
        %556 = vmatprep.mubr.f32.mxu0 0.0
        %557 = vmatmul.mubr.f32.gmra.mxu0 %v300
        %v558 = vpop.f32.mrf.mxu0
        %v559 = vadd.f32 0.0, %v558
        %v560 = vpop.f32.mrf.mxu0
        %v561 = vadd.f32 0.0, %v560
        %562 = vmatprep.mubr.f32.mxu0 0.0
        %563 = vmatmul.mubr.f32.gmra.mxu0 %v301
        %v564 = vpop.f32.mrf.mxu0
        %v565 = vadd.f32 0.0, %v564
        %v566 = vpop.f32.mrf.mxu0
        %v567 = vadd.f32 0.0, %v566
        %568 = vmatprep.mubr.f32.mxu0 0.0
        %569 = vmatmul.mubr.f32.gmra.mxu0 %v302
        %v570 = vpop.f32.mrf.mxu0
        %v571 = vadd.f32 0.0, %v570
        %v572 = vpop.f32.mrf.mxu0
        %v573 = vadd.f32 0.0, %v572
        %574 = vmatprep.mubr.f32.mxu0 0.0
        %575 = vmatmul.mubr.f32.gmra.mxu0 %v303
        %v576 = vpop.f32.mrf.mxu0
        %v577 = vadd.f32 0.0, %v576
        %v578 = vpop.f32.mrf.mxu0
        %v579 = vadd.f32 0.0, %v578
        %580 = vmatprep.mubr.f32.mxu0 0.0
        %581 = vmatmul.mubr.f32.gmra.mxu0 %v304
        %v582 = vpop.f32.mrf.mxu0
        %v583 = vadd.f32 0.0, %v582
        %v584 = vpop.f32.mrf.mxu0
        %v585 = vadd.f32 0.0, %v584
        %586 = vmatprep.mubr.f32.mxu0 0.0
        %587 = vmatmul.mubr.f32.gmra.mxu0 %v305
        %v588 = vpop.f32.mrf.mxu0
        %v589 = vadd.f32 0.0, %v588
        %v590 = vpop.f32.mrf.mxu0
        %v591 = vadd.f32 0.0, %v590
        %592 = vmatprep.mubr.f32.mxu0 0.0
        %593 = vmatmul.mubr.f32.gmra.mxu0 %v306
        %v594 = vpop.f32.mrf.mxu0
        %v595 = vadd.f32 0.0, %v594
        %v596 = vpop.f32.mrf.mxu0
        %v597 = vadd.f32 0.0, %v596
        %598 = vmatprep.mubr.f32.mxu0 0.0
        %599 = vmatmul.mubr.f32.gmra.mxu0 %v307
        %v600 = vpop.f32.mrf.mxu0
        %v601 = vadd.f32 0.0, %v600
        %v602 = vpop.f32.mrf.mxu0
        %v603 = vadd.f32 0.0, %v602
        %604 = vmatprep.mubr.f32.mxu0 0.0
        %605 = vmatmul.mubr.f32.gmra.mxu0 %v308
        %v606 = vpop.f32.mrf.mxu0
        %v607 = vadd.f32 0.0, %v606
        %v608 = vpop.f32.mrf.mxu0
        %v609 = vadd.f32 0.0, %v608
        %610 = vmatprep.mubr.f32.mxu0 0.0
        %611 = vmatmul.mubr.f32.gmra.mxu0 %v309
        %v612 = vpop.f32.mrf.mxu0
        %v613 = vadd.f32 0.0, %v612
        %v614 = vpop.f32.mrf.mxu0
        %v615 = vadd.f32 0.0, %v614
        %616 = vmatprep.mubr.f32.mxu0 0.0
        %617 = vmatmul.mubr.f32.gmra.mxu0 %v310
        %v618 = vpop.f32.mrf.mxu0
        %v619 = vadd.f32 0.0, %v618
        %v620 = vpop.f32.mrf.mxu0
        %v621 = vadd.f32 0.0, %v620
        %622 = vmatprep.mubr.f32.mxu0 0.0
        %623 = vmatmul.mubr.f32.gmra.mxu0 %v311
        %v624 = vpop.f32.mrf.mxu0
        %v625 = vadd.f32 0.0, %v624
        %v626 = vpop.f32.mrf.mxu0
        %v627 = vadd.f32 0.0, %v626
        %628 = vmatprep.mubr.f32.mxu0 0.0
        %629 = vmatmul.mubr.f32.gmra.mxu0 %v312
        %v630 = vpop.f32.mrf.mxu0
        %v631 = vadd.f32 0.0, %v630
        %v632 = vpop.f32.mrf.mxu0
        %v633 = vadd.f32 0.0, %v632
        %634 = vdwg.mxu0
        %v635 = vld [vmem:[%s2] sm:$0x1]
        %v636 = vld [vmem:[%s3] sm:$0x1]
        %637 = vadd.xlane.f32.xlu0 %v380
        %v638 = vpop.xlane.xlu0 %637
        %639 = vadd.xlane.f32.xlu0 %v386
        %v640 = vpop.xlane.xlu0 %639
        %641 = vadd.xlane.f32.xlu0 %v392
        %v642 = vpop.xlane.xlu0 %641
        %643 = vadd.xlane.f32.xlu0 %v398
        %v644 = vpop.xlane.xlu0 %643
        %645 = vadd.xlane.f32.xlu0 %v404
        %v646 = vpop.xlane.xlu0 %645
        %647 = vadd.xlane.f32.xlu0 %v410
        %v648 = vpop.xlane.xlu0 %647
        %649 = vadd.xlane.f32.xlu0 %v416
        %v650 = vpop.xlane.xlu0 %649
        %651 = vadd.xlane.f32.xlu0 %v422
        %v652 = vpop.xlane.xlu0 %651
        %653 = vadd.xlane.f32.xlu0 %v428
        %v654 = vpop.xlane.xlu0 %653
        %655 = vadd.xlane.f32.xlu0 %v434
        %v656 = vpop.xlane.xlu0 %655
        %657 = vadd.xlane.f32.xlu0 %v440
        %v658 = vpop.xlane.xlu0 %657
        %659 = vadd.xlane.f32.xlu0 %v446
        %v660 = vpop.xlane.xlu0 %659
        %661 = vadd.xlane.f32.xlu0 %v452
        %v662 = vpop.xlane.xlu0 %661
        %663 = vadd.xlane.f32.xlu0 %v458
        %v664 = vpop.xlane.xlu0 %663
        %665 = vadd.xlane.f32.xlu0 %v464
        %v666 = vpop.xlane.xlu0 %665
        %667 = vadd.xlane.f32.xlu0 %v470
        %v668 = vpop.xlane.xlu0 %667
        %v669 = vmul.f32 %v638, 0.0078125
        %v670 = vmul.f32 %v640, 0.0078125
        %v671 = vmul.f32 %v642, 0.0078125
        %v672 = vmul.f32 %v644, 0.0078125
        %v673 = vmul.f32 %v646, 0.0078125
        %v674 = vmul.f32 %v648, 0.0078125
        %v675 = vmul.f32 %v650, 0.0078125
        %v676 = vmul.f32 %v652, 0.0078125
        %v677 = vmul.f32 %v654, 0.0078125
        %v678 = vmul.f32 %v656, 0.0078125
        %v679 = vmul.f32 %v658, 0.0078125
        %v680 = vmul.f32 %v660, 0.0078125
        %v681 = vmul.f32 %v662, 0.0078125
        %v682 = vmul.f32 %v664, 0.0078125
        %v683 = vmul.f32 %v666, 0.0078125
        %v684 = vmul.f32 %v668, 0.0078125
        %v685 = vmul.f32 %v380, %v380
        %v686 = vmul.f32 %v386, %v386
        %v687 = vmul.f32 %v392, %v392
        %v688 = vmul.f32 %v398, %v398
        %v689 = vmul.f32 %v404, %v404
        %v690 = vmul.f32 %v410, %v410
        %v691 = vmul.f32 %v416, %v416
        %v692 = vmul.f32 %v422, %v422
        %v693 = vmul.f32 %v428, %v428
        %v694 = vmul.f32 %v434, %v434
        %v695 = vmul.f32 %v440, %v440
        %v696 = vmul.f32 %v446, %v446
        %v697 = vmul.f32 %v452, %v452
        %v698 = vmul.f32 %v458, %v458
        %v699 = vmul.f32 %v464, %v464
        %v700 = vmul.f32 %v470, %v470
        %701 = vadd.xlane.f32.xlu0 %v685
        %v702 = vpop.xlane.xlu0 %701
        %703 = vadd.xlane.f32.xlu0 %v686
        %v704 = vpop.xlane.xlu0 %703
        %705 = vadd.xlane.f32.xlu0 %v687
        %v706 = vpop.xlane.xlu0 %705
        %707 = vadd.xlane.f32.xlu0 %v688
        %v708 = vpop.xlane.xlu0 %707
        %709 = vadd.xlane.f32.xlu0 %v689
        %v710 = vpop.xlane.xlu0 %709
        %711 = vadd.xlane.f32.xlu0 %v690
        %v712 = vpop.xlane.xlu0 %711
        %713 = vadd.xlane.f32.xlu0 %v691
        %v714 = vpop.xlane.xlu0 %713
        %715 = vadd.xlane.f32.xlu0 %v692
        %v716 = vpop.xlane.xlu0 %715
        %717 = vadd.xlane.f32.xlu0 %v693
        %v718 = vpop.xlane.xlu0 %717
        %719 = vadd.xlane.f32.xlu0 %v694
        %v720 = vpop.xlane.xlu0 %719
        %721 = vadd.xlane.f32.xlu0 %v695
        %v722 = vpop.xlane.xlu0 %721
        %723 = vadd.xlane.f32.xlu0 %v696
        %v724 = vpop.xlane.xlu0 %723
        %725 = vadd.xlane.f32.xlu0 %v697
        %v726 = vpop.xlane.xlu0 %725
        %727 = vadd.xlane.f32.xlu0 %v698
        %v728 = vpop.xlane.xlu0 %727
        %729 = vadd.xlane.f32.xlu0 %v699
        %v730 = vpop.xlane.xlu0 %729
        %731 = vadd.xlane.f32.xlu0 %v700
        %v732 = vpop.xlane.xlu0 %731
        %v733 = vmul.f32 %v702, 0.0078125
        %v734 = vmul.f32 %v704, 0.0078125
        %v735 = vmul.f32 %v706, 0.0078125
        %v736 = vmul.f32 %v708, 0.0078125
        %v737 = vmul.f32 %v710, 0.0078125
        %v738 = vmul.f32 %v712, 0.0078125
        %v739 = vmul.f32 %v714, 0.0078125
        %v740 = vmul.f32 %v716, 0.0078125
        %v741 = vmul.f32 %v718, 0.0078125
        %v742 = vmul.f32 %v720, 0.0078125
        %v743 = vmul.f32 %v722, 0.0078125
        %v744 = vmul.f32 %v724, 0.0078125
        %v745 = vmul.f32 %v726, 0.0078125
        %v746 = vmul.f32 %v728, 0.0078125
        %v747 = vmul.f32 %v730, 0.0078125
        %v748 = vmul.f32 %v732, 0.0078125
        %v749 = vmul.f32 %v669, %v669
        %v750 = vmul.f32 %v670, %v670
        %v751 = vmul.f32 %v671, %v671
        %v752 = vmul.f32 %v672, %v672
        %v753 = vmul.f32 %v673, %v673
        %v754 = vmul.f32 %v674, %v674
        %v755 = vmul.f32 %v675, %v675
        %v756 = vmul.f32 %v676, %v676
        %v757 = vmul.f32 %v677, %v677
        %v758 = vmul.f32 %v678, %v678
        %v759 = vmul.f32 %v679, %v679
        %v760 = vmul.f32 %v680, %v680
        %v761 = vmul.f32 %v681, %v681
        %v762 = vmul.f32 %v682, %v682
        %v763 = vmul.f32 %v683, %v683
        %v764 = vmul.f32 %v684, %v684
        %v765 = vsub.f32 %v733, %v749
        %v766 = vsub.f32 %v734, %v750
        %v767 = vsub.f32 %v735, %v751
        %v768 = vsub.f32 %v736, %v752
        %v769 = vsub.f32 %v737, %v753
        %v770 = vsub.f32 %v738, %v754
        %v771 = vsub.f32 %v739, %v755
        %v772 = vsub.f32 %v740, %v756
        %v773 = vsub.f32 %v741, %v757
        %v774 = vsub.f32 %v742, %v758
        %v775 = vsub.f32 %v743, %v759
        %v776 = vsub.f32 %v744, %v760
        %v777 = vsub.f32 %v745, %v761
        %v778 = vsub.f32 %v746, %v762
        %v779 = vsub.f32 %v747, %v763
        %v780 = vsub.f32 %v748, %v764
        %v781 = vadd.f32 %v765, 1e-05
        %v782 = vadd.f32 %v766, 1e-05
        %v783 = vadd.f32 %v767, 1e-05
        %v784 = vadd.f32 %v768, 1e-05
        %v785 = vadd.f32 %v769, 1e-05
        %v786 = vadd.f32 %v770, 1e-05
        %v787 = vadd.f32 %v771, 1e-05
        %v788 = vadd.f32 %v772, 1e-05
        %v789 = vadd.f32 %v773, 1e-05
        %v790 = vadd.f32 %v774, 1e-05
        %v791 = vadd.f32 %v775, 1e-05
        %v792 = vadd.f32 %v776, 1e-05
        %v793 = vadd.f32 %v777, 1e-05
        %v794 = vadd.f32 %v778, 1e-05
        %v795 = vadd.f32 %v779, 1e-05
        %v796 = vadd.f32 %v780, 1e-05
        %v797 = vrsqrt.pop %v781
        %v798 = vrsqrt.pop %v782
        %v799 = vrsqrt.pop %v783
        %v800 = vrsqrt.pop %v784
        %v801 = vrsqrt.pop %v785
        %v802 = vrsqrt.pop %v786
        %v803 = vrsqrt.pop %v787
        %v804 = vrsqrt.pop %v788
        %v805 = vrsqrt.pop %v789
        %v806 = vrsqrt.pop %v790
        %v807 = vrsqrt.pop %v791
        %v808 = vrsqrt.pop %v792
        %v809 = vrsqrt.pop %v793
        %v810 = vrsqrt.pop %v794
        %v811 = vrsqrt.pop %v795
        %v812 = vrsqrt.pop %v796
        %v813 = vsub.f32 %v380, %v669
        %v814 = vsub.f32 %v386, %v670
        %v815 = vsub.f32 %v392, %v671
        %v816 = vsub.f32 %v398, %v672
        %v817 = vsub.f32 %v404, %v673
        %v818 = vsub.f32 %v410, %v674
        %v819 = vsub.f32 %v416, %v675
        %v820 = vsub.f32 %v422, %v676
        %v821 = vsub.f32 %v428, %v677
        %v822 = vsub.f32 %v434, %v678
        %v823 = vsub.f32 %v440, %v679
        %v824 = vsub.f32 %v446, %v680
        %v825 = vsub.f32 %v452, %v681
        %v826 = vsub.f32 %v458, %v682
        %v827 = vsub.f32 %v464, %v683
        %v828 = vsub.f32 %v470, %v684
        %v829 = vmul.f32 %v813, %v797
        %v830 = vmul.f32 %v814, %v798
        %v831 = vmul.f32 %v815, %v799
        %v832 = vmul.f32 %v816, %v800
        %v833 = vmul.f32 %v817, %v801
        %v834 = vmul.f32 %v818, %v802
        %v835 = vmul.f32 %v819, %v803
        %v836 = vmul.f32 %v820, %v804
        %v837 = vmul.f32 %v821, %v805
        %v838 = vmul.f32 %v822, %v806
        %v839 = vmul.f32 %v823, %v807
        %v840 = vmul.f32 %v824, %v808
        %v841 = vmul.f32 %v825, %v809
        %v842 = vmul.f32 %v826, %v810
        %v843 = vmul.f32 %v827, %v811
        %v844 = vmul.f32 %v828, %v812
        %v846 = vlaneseq
        %v847 = vshrl.u32 %v846, 7
        %v848 = vsub.s32 0, %v847
        %v849 = vrot.slane %v635, %v848
        %v851 = vmul.f32 %v829, %v849
        %v852 = vmul.f32 %v830, %v849
        %v853 = vmul.f32 %v831, %v849
        %v854 = vmul.f32 %v832, %v849
        %v855 = vmul.f32 %v833, %v849
        %v856 = vmul.f32 %v834, %v849
        %v857 = vmul.f32 %v835, %v849
        %v858 = vmul.f32 %v836, %v849
        %v859 = vmul.f32 %v837, %v849
        %v860 = vmul.f32 %v838, %v849
        %v861 = vmul.f32 %v839, %v849
        %v862 = vmul.f32 %v840, %v849
        %v863 = vmul.f32 %v841, %v849
        %v864 = vmul.f32 %v842, %v849
        %v865 = vmul.f32 %v843, %v849
        %v866 = vmul.f32 %v844, %v849
        %v868 = vlaneseq
        %v869 = vshrl.u32 %v868, 7
        %v870 = vsub.s32 0, %v869
        %v871 = vrot.slane %v636, %v870
        %v873 = vadd.f32 %v851, %v871
        %v874 = vadd.f32 %v852, %v871
        %v875 = vadd.f32 %v853, %v871
        %v876 = vadd.f32 %v854, %v871
        %v877 = vadd.f32 %v855, %v871
        %v878 = vadd.f32 %v856, %v871
        %v879 = vadd.f32 %v857, %v871
        %v880 = vadd.f32 %v858, %v871
        %v881 = vadd.f32 %v859, %v871
        %v882 = vadd.f32 %v860, %v871
        %v883 = vadd.f32 %v861, %v871
        %v884 = vadd.f32 %v862, %v871
        %v885 = vadd.f32 %v863, %v871
        %v886 = vadd.f32 %v864, %v871
        %v887 = vadd.f32 %v865, %v871
        %v888 = vadd.f32 %v866, %v871
        %889 = vst [vmem:[%s227] sm:$0xff] %v873
        %890 = vst [vmem:[%s227 + $0x20] sm:$0xff] %v874
        %891 = vst [vmem:[%s227 + $0x40] sm:$0xff] %v875
        %892 = vst [vmem:[%s227 + $0x60] sm:$0xff] %v876
        %893 = vst [vmem:[%s227 + $0x80] sm:$0xff] %v877
        %894 = vst [vmem:[%s227 + $0xa0] sm:$0xff] %v878
        %895 = vst [vmem:[%s227 + $0xc0] sm:$0xff] %v879
        %896 = vst [vmem:[%s227 + $0xe0] sm:$0xff] %v880
        %897 = vst [vmem:[%s227 + $0x100] sm:$0xff] %v881
        %898 = vst [vmem:[%s227 + $0x120] sm:$0xff] %v882
        %899 = vst [vmem:[%s227 + $0x140] sm:$0xff] %v883
        %900 = vst [vmem:[%s227 + $0x160] sm:$0xff] %v884
        %901 = vst [vmem:[%s227 + $0x180] sm:$0xff] %v885
        %902 = vst [vmem:[%s227 + $0x1a0] sm:$0xff] %v886
        %903 = vst [vmem:[%s227 + $0x1c0] sm:$0xff] %v887
        %904 = vst [vmem:[%s227 + $0x1e0] sm:$0xff] %v888
        %905 = vadd.xlane.f32.xlu0 %v382
        %v906 = vpop.xlane.xlu0 %905
        %907 = vadd.xlane.f32.xlu0 %v388
        %v908 = vpop.xlane.xlu0 %907
        %909 = vadd.xlane.f32.xlu0 %v394
        %v910 = vpop.xlane.xlu0 %909
        %911 = vadd.xlane.f32.xlu0 %v400
        %v912 = vpop.xlane.xlu0 %911
        %913 = vadd.xlane.f32.xlu0 %v406
        %v914 = vpop.xlane.xlu0 %913
        %915 = vadd.xlane.f32.xlu0 %v412
        %v916 = vpop.xlane.xlu0 %915
        %917 = vadd.xlane.f32.xlu0 %v418
        %v918 = vpop.xlane.xlu0 %917
        %919 = vadd.xlane.f32.xlu0 %v424
        %v920 = vpop.xlane.xlu0 %919
        %921 = vadd.xlane.f32.xlu0 %v430
        %v922 = vpop.xlane.xlu0 %921
        %923 = vadd.xlane.f32.xlu0 %v436
        %v924 = vpop.xlane.xlu0 %923
        %925 = vadd.xlane.f32.xlu0 %v442
        %v926 = vpop.xlane.xlu0 %925
        %927 = vadd.xlane.f32.xlu0 %v448
        %v928 = vpop.xlane.xlu0 %927
        %929 = vadd.xlane.f32.xlu0 %v454
        %v930 = vpop.xlane.xlu0 %929
        %931 = vadd.xlane.f32.xlu0 %v460
        %v932 = vpop.xlane.xlu0 %931
        %933 = vadd.xlane.f32.xlu0 %v466
        %v934 = vpop.xlane.xlu0 %933
        %935 = vadd.xlane.f32.xlu0 %v472
        %v936 = vpop.xlane.xlu0 %935
        %v937 = vmul.f32 %v906, 0.0078125
        %v938 = vmul.f32 %v908, 0.0078125
        %v939 = vmul.f32 %v910, 0.0078125
        %v940 = vmul.f32 %v912, 0.0078125
        %v941 = vmul.f32 %v914, 0.0078125
        %v942 = vmul.f32 %v916, 0.0078125
        %v943 = vmul.f32 %v918, 0.0078125
        %v944 = vmul.f32 %v920, 0.0078125
        %v945 = vmul.f32 %v922, 0.0078125
        %v946 = vmul.f32 %v924, 0.0078125
        %v947 = vmul.f32 %v926, 0.0078125
        %v948 = vmul.f32 %v928, 0.0078125
        %v949 = vmul.f32 %v930, 0.0078125
        %v950 = vmul.f32 %v932, 0.0078125
        %v951 = vmul.f32 %v934, 0.0078125
        %v952 = vmul.f32 %v936, 0.0078125
        %v953 = vmul.f32 %v382, %v382
        %v954 = vmul.f32 %v388, %v388
        %v955 = vmul.f32 %v394, %v394
        %v956 = vmul.f32 %v400, %v400
        %v957 = vmul.f32 %v406, %v406
        %v958 = vmul.f32 %v412, %v412
        %v959 = vmul.f32 %v418, %v418
        %v960 = vmul.f32 %v424, %v424
        %v961 = vmul.f32 %v430, %v430
        %v962 = vmul.f32 %v436, %v436
        %v963 = vmul.f32 %v442, %v442
        %v964 = vmul.f32 %v448, %v448
        %v965 = vmul.f32 %v454, %v454
        %v966 = vmul.f32 %v460, %v460
        %v967 = vmul.f32 %v466, %v466
        %v968 = vmul.f32 %v472, %v472
        %969 = vadd.xlane.f32.xlu0 %v953
        %v970 = vpop.xlane.xlu0 %969
        %971 = vadd.xlane.f32.xlu0 %v954
        %v972 = vpop.xlane.xlu0 %971
        %973 = vadd.xlane.f32.xlu0 %v955
        %v974 = vpop.xlane.xlu0 %973
        %975 = vadd.xlane.f32.xlu0 %v956
        %v976 = vpop.xlane.xlu0 %975
        %977 = vadd.xlane.f32.xlu0 %v957
        %v978 = vpop.xlane.xlu0 %977
        %979 = vadd.xlane.f32.xlu0 %v958
        %v980 = vpop.xlane.xlu0 %979
        %981 = vadd.xlane.f32.xlu0 %v959
        %v982 = vpop.xlane.xlu0 %981
        %983 = vadd.xlane.f32.xlu0 %v960
        %v984 = vpop.xlane.xlu0 %983
        %985 = vadd.xlane.f32.xlu0 %v961
        %v986 = vpop.xlane.xlu0 %985
        %987 = vadd.xlane.f32.xlu0 %v962
        %v988 = vpop.xlane.xlu0 %987
        %989 = vadd.xlane.f32.xlu0 %v963
        %v990 = vpop.xlane.xlu0 %989
        %991 = vadd.xlane.f32.xlu0 %v964
        %v992 = vpop.xlane.xlu0 %991
        %993 = vadd.xlane.f32.xlu0 %v965
        %v994 = vpop.xlane.xlu0 %993
        %995 = vadd.xlane.f32.xlu0 %v966
        %v996 = vpop.xlane.xlu0 %995
        %997 = vadd.xlane.f32.xlu0 %v967
        %v998 = vpop.xlane.xlu0 %997
        %999 = vadd.xlane.f32.xlu0 %v968
        %v1000 = vpop.xlane.xlu0 %999
        %v1001 = vmul.f32 %v970, 0.0078125
        %v1002 = vmul.f32 %v972, 0.0078125
        %v1003 = vmul.f32 %v974, 0.0078125
        %v1004 = vmul.f32 %v976, 0.0078125
        %v1005 = vmul.f32 %v978, 0.0078125
        %v1006 = vmul.f32 %v980, 0.0078125
        %v1007 = vmul.f32 %v982, 0.0078125
        %v1008 = vmul.f32 %v984, 0.0078125
        %v1009 = vmul.f32 %v986, 0.0078125
        %v1010 = vmul.f32 %v988, 0.0078125
        %v1011 = vmul.f32 %v990, 0.0078125
        %v1012 = vmul.f32 %v992, 0.0078125
        %v1013 = vmul.f32 %v994, 0.0078125
        %v1014 = vmul.f32 %v996, 0.0078125
        %v1015 = vmul.f32 %v998, 0.0078125
        %v1016 = vmul.f32 %v1000, 0.0078125
        %v1017 = vmul.f32 %v937, %v937
        %v1018 = vmul.f32 %v938, %v938
        %v1019 = vmul.f32 %v939, %v939
        %v1020 = vmul.f32 %v940, %v940
        %v1021 = vmul.f32 %v941, %v941
        %v1022 = vmul.f32 %v942, %v942
        %v1023 = vmul.f32 %v943, %v943
        %v1024 = vmul.f32 %v944, %v944
        %v1025 = vmul.f32 %v945, %v945
        %v1026 = vmul.f32 %v946, %v946
        %v1027 = vmul.f32 %v947, %v947
        %v1028 = vmul.f32 %v948, %v948
        %v1029 = vmul.f32 %v949, %v949
        %v1030 = vmul.f32 %v950, %v950
        %v1031 = vmul.f32 %v951, %v951
        %v1032 = vmul.f32 %v952, %v952
        %v1033 = vsub.f32 %v1001, %v1017
        %v1034 = vsub.f32 %v1002, %v1018
        %v1035 = vsub.f32 %v1003, %v1019
        %v1036 = vsub.f32 %v1004, %v1020
        %v1037 = vsub.f32 %v1005, %v1021
        %v1038 = vsub.f32 %v1006, %v1022
        %v1039 = vsub.f32 %v1007, %v1023
        %v1040 = vsub.f32 %v1008, %v1024
        %v1041 = vsub.f32 %v1009, %v1025
        %v1042 = vsub.f32 %v1010, %v1026
        %v1043 = vsub.f32 %v1011, %v1027
        %v1044 = vsub.f32 %v1012, %v1028
        %v1045 = vsub.f32 %v1013, %v1029
        %v1046 = vsub.f32 %v1014, %v1030
        %v1047 = vsub.f32 %v1015, %v1031
        %v1048 = vsub.f32 %v1016, %v1032
        %v1049 = vadd.f32 %v1033, 1e-05
        %v1050 = vadd.f32 %v1034, 1e-05
        %v1051 = vadd.f32 %v1035, 1e-05
        %v1052 = vadd.f32 %v1036, 1e-05
        %v1053 = vadd.f32 %v1037, 1e-05
        %v1054 = vadd.f32 %v1038, 1e-05
        %v1055 = vadd.f32 %v1039, 1e-05
        %v1056 = vadd.f32 %v1040, 1e-05
        %v1057 = vadd.f32 %v1041, 1e-05
        %v1058 = vadd.f32 %v1042, 1e-05
        %v1059 = vadd.f32 %v1043, 1e-05
        %v1060 = vadd.f32 %v1044, 1e-05
        %v1061 = vadd.f32 %v1045, 1e-05
        %v1062 = vadd.f32 %v1046, 1e-05
        %v1063 = vadd.f32 %v1047, 1e-05
        %v1064 = vadd.f32 %v1048, 1e-05
        %v1065 = vrsqrt.pop %v1049
        %v1066 = vrsqrt.pop %v1050
        %v1067 = vrsqrt.pop %v1051
        %v1068 = vrsqrt.pop %v1052
        %v1069 = vrsqrt.pop %v1053
        %v1070 = vrsqrt.pop %v1054
        %v1071 = vrsqrt.pop %v1055
        %v1072 = vrsqrt.pop %v1056
        %v1073 = vrsqrt.pop %v1057
        %v1074 = vrsqrt.pop %v1058
        %v1075 = vrsqrt.pop %v1059
        %v1076 = vrsqrt.pop %v1060
        %v1077 = vrsqrt.pop %v1061
        %v1078 = vrsqrt.pop %v1062
        %v1079 = vrsqrt.pop %v1063
        %v1080 = vrsqrt.pop %v1064
        %v1081 = vsub.f32 %v382, %v937
        %v1082 = vsub.f32 %v388, %v938
        %v1083 = vsub.f32 %v394, %v939
        %v1084 = vsub.f32 %v400, %v940
        %v1085 = vsub.f32 %v406, %v941
        %v1086 = vsub.f32 %v412, %v942
        %v1087 = vsub.f32 %v418, %v943
        %v1088 = vsub.f32 %v424, %v944
        %v1089 = vsub.f32 %v430, %v945
        %v1090 = vsub.f32 %v436, %v946
        %v1091 = vsub.f32 %v442, %v947
        %v1092 = vsub.f32 %v448, %v948
        %v1093 = vsub.f32 %v454, %v949
        %v1094 = vsub.f32 %v460, %v950
        %v1095 = vsub.f32 %v466, %v951
        %v1096 = vsub.f32 %v472, %v952
        %v1097 = vmul.f32 %v1081, %v1065
        %v1098 = vmul.f32 %v1082, %v1066
        %v1099 = vmul.f32 %v1083, %v1067
        %v1100 = vmul.f32 %v1084, %v1068
        %v1101 = vmul.f32 %v1085, %v1069
        %v1102 = vmul.f32 %v1086, %v1070
        %v1103 = vmul.f32 %v1087, %v1071
        %v1104 = vmul.f32 %v1088, %v1072
        %v1105 = vmul.f32 %v1089, %v1073
        %v1106 = vmul.f32 %v1090, %v1074
        %v1107 = vmul.f32 %v1091, %v1075
        %v1108 = vmul.f32 %v1092, %v1076
        %v1109 = vmul.f32 %v1093, %v1077
        %v1110 = vmul.f32 %v1094, %v1078
        %v1111 = vmul.f32 %v1095, %v1079
        %v1112 = vmul.f32 %v1096, %v1080
        %v1113 = vmul.f32 %v1097, %v849
        %v1114 = vmul.f32 %v1098, %v849
        %v1115 = vmul.f32 %v1099, %v849
        %v1116 = vmul.f32 %v1100, %v849
        %v1117 = vmul.f32 %v1101, %v849
        %v1118 = vmul.f32 %v1102, %v849
        %v1119 = vmul.f32 %v1103, %v849
        %v1120 = vmul.f32 %v1104, %v849
        %v1121 = vmul.f32 %v1105, %v849
        %v1122 = vmul.f32 %v1106, %v849
        %v1123 = vmul.f32 %v1107, %v849
        %v1124 = vmul.f32 %v1108, %v849
        %v1125 = vmul.f32 %v1109, %v849
        %v1126 = vmul.f32 %v1110, %v849
        %v1127 = vmul.f32 %v1111, %v849
        %v1128 = vmul.f32 %v1112, %v849
        %v1129 = vadd.f32 %v1113, %v871
        %v1130 = vadd.f32 %v1114, %v871
        %v1131 = vadd.f32 %v1115, %v871
        %v1132 = vadd.f32 %v1116, %v871
        %v1133 = vadd.f32 %v1117, %v871
        %v1134 = vadd.f32 %v1118, %v871
        %v1135 = vadd.f32 %v1119, %v871
        %v1136 = vadd.f32 %v1120, %v871
        %v1137 = vadd.f32 %v1121, %v871
        %v1138 = vadd.f32 %v1122, %v871
        %v1139 = vadd.f32 %v1123, %v871
        %v1140 = vadd.f32 %v1124, %v871
        %v1141 = vadd.f32 %v1125, %v871
        %v1142 = vadd.f32 %v1126, %v871
        %v1143 = vadd.f32 %v1127, %v871
        %v1144 = vadd.f32 %v1128, %v871
        %1145 = vst [vmem:[%s227 + $0x8] sm:$0xff] %v1129
        %1146 = vst [vmem:[%s227 + $0x28] sm:$0xff] %v1130
        %1147 = vst [vmem:[%s227 + $0x48] sm:$0xff] %v1131
        %1148 = vst [vmem:[%s227 + $0x68] sm:$0xff] %v1132
        %1149 = vst [vmem:[%s227 + $0x88] sm:$0xff] %v1133
        %1150 = vst [vmem:[%s227 + $0xa8] sm:$0xff] %v1134
        %1151 = vst [vmem:[%s227 + $0xc8] sm:$0xff] %v1135
        %1152 = vst [vmem:[%s227 + $0xe8] sm:$0xff] %v1136
        %1153 = vst [vmem:[%s227 + $0x108] sm:$0xff] %v1137
        %1154 = vst [vmem:[%s227 + $0x128] sm:$0xff] %v1138
        %1155 = vst [vmem:[%s227 + $0x148] sm:$0xff] %v1139
        %1156 = vst [vmem:[%s227 + $0x168] sm:$0xff] %v1140
        %1157 = vst [vmem:[%s227 + $0x188] sm:$0xff] %v1141
        %1158 = vst [vmem:[%s227 + $0x1a8] sm:$0xff] %v1142
        %1159 = vst [vmem:[%s227 + $0x1c8] sm:$0xff] %v1143
        %1160 = vst [vmem:[%s227 + $0x1e8] sm:$0xff] %v1144
        %1161 = vadd.xlane.f32.xlu0 %v541
        %v1162 = vpop.xlane.xlu0 %1161
        %1163 = vadd.xlane.f32.xlu0 %v547
        %v1164 = vpop.xlane.xlu0 %1163
        %1165 = vadd.xlane.f32.xlu0 %v553
        %v1166 = vpop.xlane.xlu0 %1165
        %1167 = vadd.xlane.f32.xlu0 %v559
        %v1168 = vpop.xlane.xlu0 %1167
        %1169 = vadd.xlane.f32.xlu0 %v565
        %v1170 = vpop.xlane.xlu0 %1169
        %1171 = vadd.xlane.f32.xlu0 %v571
        %v1172 = vpop.xlane.xlu0 %1171
        %1173 = vadd.xlane.f32.xlu0 %v577
        %v1174 = vpop.xlane.xlu0 %1173
        %1175 = vadd.xlane.f32.xlu0 %v583
        %v1176 = vpop.xlane.xlu0 %1175
        %1177 = vadd.xlane.f32.xlu0 %v589
        %v1178 = vpop.xlane.xlu0 %1177
        %1179 = vadd.xlane.f32.xlu0 %v595
        %v1180 = vpop.xlane.xlu0 %1179
        %1181 = vadd.xlane.f32.xlu0 %v601
        %v1182 = vpop.xlane.xlu0 %1181
        %1183 = vadd.xlane.f32.xlu0 %v607
        %v1184 = vpop.xlane.xlu0 %1183
        %1185 = vadd.xlane.f32.xlu0 %v613
        %v1186 = vpop.xlane.xlu0 %1185
        %1187 = vadd.xlane.f32.xlu0 %v619
        %v1188 = vpop.xlane.xlu0 %1187
        %1189 = vadd.xlane.f32.xlu0 %v625
        %v1190 = vpop.xlane.xlu0 %1189
        %1191 = vadd.xlane.f32.xlu0 %v631
        %v1192 = vpop.xlane.xlu0 %1191
        %v1193 = vmul.f32 %v1162, 0.0078125
        %v1194 = vmul.f32 %v1164, 0.0078125
        %v1195 = vmul.f32 %v1166, 0.0078125
        %v1196 = vmul.f32 %v1168, 0.0078125
        %v1197 = vmul.f32 %v1170, 0.0078125
        %v1198 = vmul.f32 %v1172, 0.0078125
        %v1199 = vmul.f32 %v1174, 0.0078125
        %v1200 = vmul.f32 %v1176, 0.0078125
        %v1201 = vmul.f32 %v1178, 0.0078125
        %v1202 = vmul.f32 %v1180, 0.0078125
        %v1203 = vmul.f32 %v1182, 0.0078125
        %v1204 = vmul.f32 %v1184, 0.0078125
        %v1205 = vmul.f32 %v1186, 0.0078125
        %v1206 = vmul.f32 %v1188, 0.0078125
        %v1207 = vmul.f32 %v1190, 0.0078125
        %v1208 = vmul.f32 %v1192, 0.0078125
        %v1209 = vmul.f32 %v541, %v541
        %v1210 = vmul.f32 %v547, %v547
        %v1211 = vmul.f32 %v553, %v553
        %v1212 = vmul.f32 %v559, %v559
        %v1213 = vmul.f32 %v565, %v565
        %v1214 = vmul.f32 %v571, %v571
        %v1215 = vmul.f32 %v577, %v577
        %v1216 = vmul.f32 %v583, %v583
        %v1217 = vmul.f32 %v589, %v589
        %v1218 = vmul.f32 %v595, %v595
        %v1219 = vmul.f32 %v601, %v601
        %v1220 = vmul.f32 %v607, %v607
        %v1221 = vmul.f32 %v613, %v613
        %v1222 = vmul.f32 %v619, %v619
        %v1223 = vmul.f32 %v625, %v625
        %v1224 = vmul.f32 %v631, %v631
        %1225 = vadd.xlane.f32.xlu0 %v1209
        %v1226 = vpop.xlane.xlu0 %1225
        %1227 = vadd.xlane.f32.xlu0 %v1210
        %v1228 = vpop.xlane.xlu0 %1227
        %1229 = vadd.xlane.f32.xlu0 %v1211
        %v1230 = vpop.xlane.xlu0 %1229
        %1231 = vadd.xlane.f32.xlu0 %v1212
        %v1232 = vpop.xlane.xlu0 %1231
        %1233 = vadd.xlane.f32.xlu0 %v1213
        %v1234 = vpop.xlane.xlu0 %1233
        %1235 = vadd.xlane.f32.xlu0 %v1214
        %v1236 = vpop.xlane.xlu0 %1235
        %1237 = vadd.xlane.f32.xlu0 %v1215
        %v1238 = vpop.xlane.xlu0 %1237
        %1239 = vadd.xlane.f32.xlu0 %v1216
        %v1240 = vpop.xlane.xlu0 %1239
        %1241 = vadd.xlane.f32.xlu0 %v1217
        %v1242 = vpop.xlane.xlu0 %1241
        %1243 = vadd.xlane.f32.xlu0 %v1218
        %v1244 = vpop.xlane.xlu0 %1243
        %1245 = vadd.xlane.f32.xlu0 %v1219
        %v1246 = vpop.xlane.xlu0 %1245
        %1247 = vadd.xlane.f32.xlu0 %v1220
        %v1248 = vpop.xlane.xlu0 %1247
        %1249 = vadd.xlane.f32.xlu0 %v1221
        %v1250 = vpop.xlane.xlu0 %1249
        %1251 = vadd.xlane.f32.xlu0 %v1222
        %v1252 = vpop.xlane.xlu0 %1251
        %1253 = vadd.xlane.f32.xlu0 %v1223
        %v1254 = vpop.xlane.xlu0 %1253
        %1255 = vadd.xlane.f32.xlu0 %v1224
        %v1256 = vpop.xlane.xlu0 %1255
        %v1257 = vmul.f32 %v1226, 0.0078125
        %v1258 = vmul.f32 %v1228, 0.0078125
        %v1259 = vmul.f32 %v1230, 0.0078125
        %v1260 = vmul.f32 %v1232, 0.0078125
        %v1261 = vmul.f32 %v1234, 0.0078125
        %v1262 = vmul.f32 %v1236, 0.0078125
        %v1263 = vmul.f32 %v1238, 0.0078125
        %v1264 = vmul.f32 %v1240, 0.0078125
        %v1265 = vmul.f32 %v1242, 0.0078125
        %v1266 = vmul.f32 %v1244, 0.0078125
        %v1267 = vmul.f32 %v1246, 0.0078125
        %v1268 = vmul.f32 %v1248, 0.0078125
        %v1269 = vmul.f32 %v1250, 0.0078125
        %v1270 = vmul.f32 %v1252, 0.0078125
        %v1271 = vmul.f32 %v1254, 0.0078125
        %v1272 = vmul.f32 %v1256, 0.0078125
        %v1273 = vmul.f32 %v1193, %v1193
        %v1274 = vmul.f32 %v1194, %v1194
        %v1275 = vmul.f32 %v1195, %v1195
        %v1276 = vmul.f32 %v1196, %v1196
        %v1277 = vmul.f32 %v1197, %v1197
        %v1278 = vmul.f32 %v1198, %v1198
        %v1279 = vmul.f32 %v1199, %v1199
        %v1280 = vmul.f32 %v1200, %v1200
        %v1281 = vmul.f32 %v1201, %v1201
        %v1282 = vmul.f32 %v1202, %v1202
        %v1283 = vmul.f32 %v1203, %v1203
        %v1284 = vmul.f32 %v1204, %v1204
        %v1285 = vmul.f32 %v1205, %v1205
        %v1286 = vmul.f32 %v1206, %v1206
        %v1287 = vmul.f32 %v1207, %v1207
        %v1288 = vmul.f32 %v1208, %v1208
        %v1289 = vsub.f32 %v1257, %v1273
        %v1290 = vsub.f32 %v1258, %v1274
        %v1291 = vsub.f32 %v1259, %v1275
        %v1292 = vsub.f32 %v1260, %v1276
        %v1293 = vsub.f32 %v1261, %v1277
        %v1294 = vsub.f32 %v1262, %v1278
        %v1295 = vsub.f32 %v1263, %v1279
        %v1296 = vsub.f32 %v1264, %v1280
        %v1297 = vsub.f32 %v1265, %v1281
        %v1298 = vsub.f32 %v1266, %v1282
        %v1299 = vsub.f32 %v1267, %v1283
        %v1300 = vsub.f32 %v1268, %v1284
        %v1301 = vsub.f32 %v1269, %v1285
        %v1302 = vsub.f32 %v1270, %v1286
        %v1303 = vsub.f32 %v1271, %v1287
        %v1304 = vsub.f32 %v1272, %v1288
        %v1305 = vadd.f32 %v1289, 1e-05
        %v1306 = vadd.f32 %v1290, 1e-05
        %v1307 = vadd.f32 %v1291, 1e-05
        %v1308 = vadd.f32 %v1292, 1e-05
        %v1309 = vadd.f32 %v1293, 1e-05
        %v1310 = vadd.f32 %v1294, 1e-05
        %v1311 = vadd.f32 %v1295, 1e-05
        %v1312 = vadd.f32 %v1296, 1e-05
        %v1313 = vadd.f32 %v1297, 1e-05
        %v1314 = vadd.f32 %v1298, 1e-05
        %v1315 = vadd.f32 %v1299, 1e-05
        %v1316 = vadd.f32 %v1300, 1e-05
        %v1317 = vadd.f32 %v1301, 1e-05
        %v1318 = vadd.f32 %v1302, 1e-05
        %v1319 = vadd.f32 %v1303, 1e-05
        %v1320 = vadd.f32 %v1304, 1e-05
        %v1321 = vrsqrt.pop %v1305
        %v1322 = vrsqrt.pop %v1306
        %v1323 = vrsqrt.pop %v1307
        %v1324 = vrsqrt.pop %v1308
        %v1325 = vrsqrt.pop %v1309
        %v1326 = vrsqrt.pop %v1310
        %v1327 = vrsqrt.pop %v1311
        %v1328 = vrsqrt.pop %v1312
        %v1329 = vrsqrt.pop %v1313
        %v1330 = vrsqrt.pop %v1314
        %v1331 = vrsqrt.pop %v1315
        %v1332 = vrsqrt.pop %v1316
        %v1333 = vrsqrt.pop %v1317
        %v1334 = vrsqrt.pop %v1318
        %v1335 = vrsqrt.pop %v1319
        %v1336 = vrsqrt.pop %v1320
        %v1337 = vsub.f32 %v541, %v1193
        %v1338 = vsub.f32 %v547, %v1194
        %v1339 = vsub.f32 %v553, %v1195
        %v1340 = vsub.f32 %v559, %v1196
        %v1341 = vsub.f32 %v565, %v1197
        %v1342 = vsub.f32 %v571, %v1198
        %v1343 = vsub.f32 %v577, %v1199
        %v1344 = vsub.f32 %v583, %v1200
        %v1345 = vsub.f32 %v589, %v1201
        %v1346 = vsub.f32 %v595, %v1202
        %v1347 = vsub.f32 %v601, %v1203
        %v1348 = vsub.f32 %v607, %v1204
        %v1349 = vsub.f32 %v613, %v1205
        %v1350 = vsub.f32 %v619, %v1206
        %v1351 = vsub.f32 %v625, %v1207
        %v1352 = vsub.f32 %v631, %v1208
        %v1353 = vmul.f32 %v1337, %v1321
        %v1354 = vmul.f32 %v1338, %v1322
        %v1355 = vmul.f32 %v1339, %v1323
        %v1356 = vmul.f32 %v1340, %v1324
        %v1357 = vmul.f32 %v1341, %v1325
        %v1358 = vmul.f32 %v1342, %v1326
        %v1359 = vmul.f32 %v1343, %v1327
        %v1360 = vmul.f32 %v1344, %v1328
        %v1361 = vmul.f32 %v1345, %v1329
        %v1362 = vmul.f32 %v1346, %v1330
        %v1363 = vmul.f32 %v1347, %v1331
        %v1364 = vmul.f32 %v1348, %v1332
        %v1365 = vmul.f32 %v1349, %v1333
        %v1366 = vmul.f32 %v1350, %v1334
        %v1367 = vmul.f32 %v1351, %v1335
        %v1368 = vmul.f32 %v1352, %v1336
        %v1369 = vmul.f32 %v1353, %v849
        %v1370 = vmul.f32 %v1354, %v849
        %v1371 = vmul.f32 %v1355, %v849
        %v1372 = vmul.f32 %v1356, %v849
        %v1373 = vmul.f32 %v1357, %v849
        %v1374 = vmul.f32 %v1358, %v849
        %v1375 = vmul.f32 %v1359, %v849
        %v1376 = vmul.f32 %v1360, %v849
        %v1377 = vmul.f32 %v1361, %v849
        %v1378 = vmul.f32 %v1362, %v849
        %v1379 = vmul.f32 %v1363, %v849
        %v1380 = vmul.f32 %v1364, %v849
        %v1381 = vmul.f32 %v1365, %v849
        %v1382 = vmul.f32 %v1366, %v849
        %v1383 = vmul.f32 %v1367, %v849
        %v1384 = vmul.f32 %v1368, %v849
        %v1385 = vadd.f32 %v1369, %v871
        %v1386 = vadd.f32 %v1370, %v871
        %v1387 = vadd.f32 %v1371, %v871
        %v1388 = vadd.f32 %v1372, %v871
        %v1389 = vadd.f32 %v1373, %v871
        %v1390 = vadd.f32 %v1374, %v871
        %v1391 = vadd.f32 %v1375, %v871
        %v1392 = vadd.f32 %v1376, %v871
        %v1393 = vadd.f32 %v1377, %v871
        %v1394 = vadd.f32 %v1378, %v871
        %v1395 = vadd.f32 %v1379, %v871
        %v1396 = vadd.f32 %v1380, %v871
        %v1397 = vadd.f32 %v1381, %v871
        %v1398 = vadd.f32 %v1382, %v871
        %v1399 = vadd.f32 %v1383, %v871
        %v1400 = vadd.f32 %v1384, %v871
        %1401 = vst [vmem:[%s227 + $0x10] sm:$0xff] %v1385
        %1402 = vst [vmem:[%s227 + $0x30] sm:$0xff] %v1386
        %1403 = vst [vmem:[%s227 + $0x50] sm:$0xff] %v1387
        %1404 = vst [vmem:[%s227 + $0x70] sm:$0xff] %v1388
        %1405 = vst [vmem:[%s227 + $0x90] sm:$0xff] %v1389
        %1406 = vst [vmem:[%s227 + $0xb0] sm:$0xff] %v1390
        %1407 = vst [vmem:[%s227 + $0xd0] sm:$0xff] %v1391
        %1408 = vst [vmem:[%s227 + $0xf0] sm:$0xff] %v1392
        %1409 = vst [vmem:[%s227 + $0x110] sm:$0xff] %v1393
        %1410 = vst [vmem:[%s227 + $0x130] sm:$0xff] %v1394
        %1411 = vst [vmem:[%s227 + $0x150] sm:$0xff] %v1395
        %1412 = vst [vmem:[%s227 + $0x170] sm:$0xff] %v1396
        %1413 = vst [vmem:[%s227 + $0x190] sm:$0xff] %v1397
        %1414 = vst [vmem:[%s227 + $0x1b0] sm:$0xff] %v1398
        %1415 = vst [vmem:[%s227 + $0x1d0] sm:$0xff] %v1399
        %1416 = vst [vmem:[%s227 + $0x1f0] sm:$0xff] %v1400
        %1417 = vadd.xlane.f32.xlu0 %v543
        %v1418 = vpop.xlane.xlu0 %1417
        %1419 = vadd.xlane.f32.xlu0 %v549
        %v1420 = vpop.xlane.xlu0 %1419
        %1421 = vadd.xlane.f32.xlu0 %v555
        %v1422 = vpop.xlane.xlu0 %1421
        %1423 = vadd.xlane.f32.xlu0 %v561
        %v1424 = vpop.xlane.xlu0 %1423
        %1425 = vadd.xlane.f32.xlu0 %v567
        %v1426 = vpop.xlane.xlu0 %1425
        %1427 = vadd.xlane.f32.xlu0 %v573
        %v1428 = vpop.xlane.xlu0 %1427
        %1429 = vadd.xlane.f32.xlu0 %v579
        %v1430 = vpop.xlane.xlu0 %1429
        %1431 = vadd.xlane.f32.xlu0 %v585
        %v1432 = vpop.xlane.xlu0 %1431
        %1433 = vadd.xlane.f32.xlu0 %v591
        %v1434 = vpop.xlane.xlu0 %1433
        %1435 = vadd.xlane.f32.xlu0 %v597
        %v1436 = vpop.xlane.xlu0 %1435
        %1437 = vadd.xlane.f32.xlu0 %v603
        %v1438 = vpop.xlane.xlu0 %1437
        %1439 = vadd.xlane.f32.xlu0 %v609
        %v1440 = vpop.xlane.xlu0 %1439
        %1441 = vadd.xlane.f32.xlu0 %v615
        %v1442 = vpop.xlane.xlu0 %1441
        %1443 = vadd.xlane.f32.xlu0 %v621
        %v1444 = vpop.xlane.xlu0 %1443
        %1445 = vadd.xlane.f32.xlu0 %v627
        %v1446 = vpop.xlane.xlu0 %1445
        %1447 = vadd.xlane.f32.xlu0 %v633
        %v1448 = vpop.xlane.xlu0 %1447
        %v1449 = vmul.f32 %v1418, 0.0078125
        %v1450 = vmul.f32 %v1420, 0.0078125
        %v1451 = vmul.f32 %v1422, 0.0078125
        %v1452 = vmul.f32 %v1424, 0.0078125
        %v1453 = vmul.f32 %v1426, 0.0078125
        %v1454 = vmul.f32 %v1428, 0.0078125
        %v1455 = vmul.f32 %v1430, 0.0078125
        %v1456 = vmul.f32 %v1432, 0.0078125
        %v1457 = vmul.f32 %v1434, 0.0078125
        %v1458 = vmul.f32 %v1436, 0.0078125
        %v1459 = vmul.f32 %v1438, 0.0078125
        %v1460 = vmul.f32 %v1440, 0.0078125
        %v1461 = vmul.f32 %v1442, 0.0078125
        %v1462 = vmul.f32 %v1444, 0.0078125
        %v1463 = vmul.f32 %v1446, 0.0078125
        %v1464 = vmul.f32 %v1448, 0.0078125
        %v1465 = vmul.f32 %v543, %v543
        %v1466 = vmul.f32 %v549, %v549
        %v1467 = vmul.f32 %v555, %v555
        %v1468 = vmul.f32 %v561, %v561
        %v1469 = vmul.f32 %v567, %v567
        %v1470 = vmul.f32 %v573, %v573
        %v1471 = vmul.f32 %v579, %v579
        %v1472 = vmul.f32 %v585, %v585
        %v1473 = vmul.f32 %v591, %v591
        %v1474 = vmul.f32 %v597, %v597
        %v1475 = vmul.f32 %v603, %v603
        %v1476 = vmul.f32 %v609, %v609
        %v1477 = vmul.f32 %v615, %v615
        %v1478 = vmul.f32 %v621, %v621
        %v1479 = vmul.f32 %v627, %v627
        %v1480 = vmul.f32 %v633, %v633
        %1481 = vadd.xlane.f32.xlu0 %v1465
        %v1482 = vpop.xlane.xlu0 %1481
        %1483 = vadd.xlane.f32.xlu0 %v1466
        %v1484 = vpop.xlane.xlu0 %1483
        %1485 = vadd.xlane.f32.xlu0 %v1467
        %v1486 = vpop.xlane.xlu0 %1485
        %1487 = vadd.xlane.f32.xlu0 %v1468
        %v1488 = vpop.xlane.xlu0 %1487
        %1489 = vadd.xlane.f32.xlu0 %v1469
        %v1490 = vpop.xlane.xlu0 %1489
        %1491 = vadd.xlane.f32.xlu0 %v1470
        %v1492 = vpop.xlane.xlu0 %1491
        %1493 = vadd.xlane.f32.xlu0 %v1471
        %v1494 = vpop.xlane.xlu0 %1493
        %1495 = vadd.xlane.f32.xlu0 %v1472
        %v1496 = vpop.xlane.xlu0 %1495
        %1497 = vadd.xlane.f32.xlu0 %v1473
        %v1498 = vpop.xlane.xlu0 %1497
        %1499 = vadd.xlane.f32.xlu0 %v1474
        %v1500 = vpop.xlane.xlu0 %1499
        %1501 = vadd.xlane.f32.xlu0 %v1475
        %v1502 = vpop.xlane.xlu0 %1501
        %1503 = vadd.xlane.f32.xlu0 %v1476
        %v1504 = vpop.xlane.xlu0 %1503
        %1505 = vadd.xlane.f32.xlu0 %v1477
        %v1506 = vpop.xlane.xlu0 %1505
        %1507 = vadd.xlane.f32.xlu0 %v1478
        %v1508 = vpop.xlane.xlu0 %1507
        %1509 = vadd.xlane.f32.xlu0 %v1479
        %v1510 = vpop.xlane.xlu0 %1509
        %1511 = vadd.xlane.f32.xlu0 %v1480
        %v1512 = vpop.xlane.xlu0 %1511
        %v1513 = vmul.f32 %v1482, 0.0078125
        %v1514 = vmul.f32 %v1484, 0.0078125
        %v1515 = vmul.f32 %v1486, 0.0078125
        %v1516 = vmul.f32 %v1488, 0.0078125
        %v1517 = vmul.f32 %v1490, 0.0078125
        %v1518 = vmul.f32 %v1492, 0.0078125
        %v1519 = vmul.f32 %v1494, 0.0078125
        %v1520 = vmul.f32 %v1496, 0.0078125
        %v1521 = vmul.f32 %v1498, 0.0078125
        %v1522 = vmul.f32 %v1500, 0.0078125
        %v1523 = vmul.f32 %v1502, 0.0078125
        %v1524 = vmul.f32 %v1504, 0.0078125
        %v1525 = vmul.f32 %v1506, 0.0078125
        %v1526 = vmul.f32 %v1508, 0.0078125
        %v1527 = vmul.f32 %v1510, 0.0078125
        %v1528 = vmul.f32 %v1512, 0.0078125
        %v1529 = vmul.f32 %v1449, %v1449
        %v1530 = vmul.f32 %v1450, %v1450
        %v1531 = vmul.f32 %v1451, %v1451
        %v1532 = vmul.f32 %v1452, %v1452
        %v1533 = vmul.f32 %v1453, %v1453
        %v1534 = vmul.f32 %v1454, %v1454
        %v1535 = vmul.f32 %v1455, %v1455
        %v1536 = vmul.f32 %v1456, %v1456
        %v1537 = vmul.f32 %v1457, %v1457
        %v1538 = vmul.f32 %v1458, %v1458
        %v1539 = vmul.f32 %v1459, %v1459
        %v1540 = vmul.f32 %v1460, %v1460
        %v1541 = vmul.f32 %v1461, %v1461
        %v1542 = vmul.f32 %v1462, %v1462
        %v1543 = vmul.f32 %v1463, %v1463
        %v1544 = vmul.f32 %v1464, %v1464
        %v1545 = vsub.f32 %v1513, %v1529
        %v1546 = vsub.f32 %v1514, %v1530
        %v1547 = vsub.f32 %v1515, %v1531
        %v1548 = vsub.f32 %v1516, %v1532
        %v1549 = vsub.f32 %v1517, %v1533
        %v1550 = vsub.f32 %v1518, %v1534
        %v1551 = vsub.f32 %v1519, %v1535
        %v1552 = vsub.f32 %v1520, %v1536
        %v1553 = vsub.f32 %v1521, %v1537
        %v1554 = vsub.f32 %v1522, %v1538
        %v1555 = vsub.f32 %v1523, %v1539
        %v1556 = vsub.f32 %v1524, %v1540
        %v1557 = vsub.f32 %v1525, %v1541
        %v1558 = vsub.f32 %v1526, %v1542
        %v1559 = vsub.f32 %v1527, %v1543
        %v1560 = vsub.f32 %v1528, %v1544
        %v1561 = vadd.f32 %v1545, 1e-05
        %v1562 = vadd.f32 %v1546, 1e-05
        %v1563 = vadd.f32 %v1547, 1e-05
        %v1564 = vadd.f32 %v1548, 1e-05
        %v1565 = vadd.f32 %v1549, 1e-05
        %v1566 = vadd.f32 %v1550, 1e-05
        %v1567 = vadd.f32 %v1551, 1e-05
        %v1568 = vadd.f32 %v1552, 1e-05
        %v1569 = vadd.f32 %v1553, 1e-05
        %v1570 = vadd.f32 %v1554, 1e-05
        %v1571 = vadd.f32 %v1555, 1e-05
        %v1572 = vadd.f32 %v1556, 1e-05
        %v1573 = vadd.f32 %v1557, 1e-05
        %v1574 = vadd.f32 %v1558, 1e-05
        %v1575 = vadd.f32 %v1559, 1e-05
        %v1576 = vadd.f32 %v1560, 1e-05
        %v1577 = vrsqrt.pop %v1561
        %v1578 = vrsqrt.pop %v1562
        %v1579 = vrsqrt.pop %v1563
        %v1580 = vrsqrt.pop %v1564
        %v1581 = vrsqrt.pop %v1565
        %v1582 = vrsqrt.pop %v1566
        %v1583 = vrsqrt.pop %v1567
        %v1584 = vrsqrt.pop %v1568
        %v1585 = vrsqrt.pop %v1569
        %v1586 = vrsqrt.pop %v1570
        %v1587 = vrsqrt.pop %v1571
        %v1588 = vrsqrt.pop %v1572
        %v1589 = vrsqrt.pop %v1573
        %v1590 = vrsqrt.pop %v1574
        %v1591 = vrsqrt.pop %v1575
        %v1592 = vrsqrt.pop %v1576
        %v1593 = vsub.f32 %v543, %v1449
        %v1594 = vsub.f32 %v549, %v1450
        %v1595 = vsub.f32 %v555, %v1451
        %v1596 = vsub.f32 %v561, %v1452
        %v1597 = vsub.f32 %v567, %v1453
        %v1598 = vsub.f32 %v573, %v1454
        %v1599 = vsub.f32 %v579, %v1455
        %v1600 = vsub.f32 %v585, %v1456
        %v1601 = vsub.f32 %v591, %v1457
        %v1602 = vsub.f32 %v597, %v1458
        %v1603 = vsub.f32 %v603, %v1459
        %v1604 = vsub.f32 %v609, %v1460
        %v1605 = vsub.f32 %v615, %v1461
        %v1606 = vsub.f32 %v621, %v1462
        %v1607 = vsub.f32 %v627, %v1463
        %v1608 = vsub.f32 %v633, %v1464
        %v1609 = vmul.f32 %v1593, %v1577
        %v1610 = vmul.f32 %v1594, %v1578
        %v1611 = vmul.f32 %v1595, %v1579
        %v1612 = vmul.f32 %v1596, %v1580
        %v1613 = vmul.f32 %v1597, %v1581
        %v1614 = vmul.f32 %v1598, %v1582
        %v1615 = vmul.f32 %v1599, %v1583
        %v1616 = vmul.f32 %v1600, %v1584
        %v1617 = vmul.f32 %v1601, %v1585
        %v1618 = vmul.f32 %v1602, %v1586
        %v1619 = vmul.f32 %v1603, %v1587
        %v1620 = vmul.f32 %v1604, %v1588
        %v1621 = vmul.f32 %v1605, %v1589
        %v1622 = vmul.f32 %v1606, %v1590
        %v1623 = vmul.f32 %v1607, %v1591
        %v1624 = vmul.f32 %v1608, %v1592
        %v1625 = vmul.f32 %v1609, %v849
        %v1626 = vmul.f32 %v1610, %v849
        %v1627 = vmul.f32 %v1611, %v849
        %v1628 = vmul.f32 %v1612, %v849
        %v1629 = vmul.f32 %v1613, %v849
        %v1630 = vmul.f32 %v1614, %v849
        %v1631 = vmul.f32 %v1615, %v849
        %v1632 = vmul.f32 %v1616, %v849
        %v1633 = vmul.f32 %v1617, %v849
        %v1634 = vmul.f32 %v1618, %v849
        %v1635 = vmul.f32 %v1619, %v849
        %v1636 = vmul.f32 %v1620, %v849
        %v1637 = vmul.f32 %v1621, %v849
        %v1638 = vmul.f32 %v1622, %v849
        %v1639 = vmul.f32 %v1623, %v849
        %v1640 = vmul.f32 %v1624, %v849
        %v1641 = vadd.f32 %v1625, %v871
        %v1642 = vadd.f32 %v1626, %v871
        %v1643 = vadd.f32 %v1627, %v871
        %v1644 = vadd.f32 %v1628, %v871
        %v1645 = vadd.f32 %v1629, %v871
        %v1646 = vadd.f32 %v1630, %v871
        %v1647 = vadd.f32 %v1631, %v871
        %v1648 = vadd.f32 %v1632, %v871
        %v1649 = vadd.f32 %v1633, %v871
        %v1650 = vadd.f32 %v1634, %v871
        %v1651 = vadd.f32 %v1635, %v871
        %v1652 = vadd.f32 %v1636, %v871
        %v1653 = vadd.f32 %v1637, %v871
        %v1654 = vadd.f32 %v1638, %v871
        %v1655 = vadd.f32 %v1639, %v871
        %v1656 = vadd.f32 %v1640, %v871
        %1657 = vst [vmem:[%s227 + $0x18] sm:$0xff] %v1641
        %1658 = vst [vmem:[%s227 + $0x38] sm:$0xff] %v1642
        %1659 = vst [vmem:[%s227 + $0x58] sm:$0xff] %v1643
        %1660 = vst [vmem:[%s227 + $0x78] sm:$0xff] %v1644
        %1661 = vst [vmem:[%s227 + $0x98] sm:$0xff] %v1645
        %1662 = vst [vmem:[%s227 + $0xb8] sm:$0xff] %v1646
        %1663 = vst [vmem:[%s227 + $0xd8] sm:$0xff] %v1647
        %1664 = vst [vmem:[%s227 + $0xf8] sm:$0xff] %v1648
        %1665 = vst [vmem:[%s227 + $0x118] sm:$0xff] %v1649
        %1666 = vst [vmem:[%s227 + $0x138] sm:$0xff] %v1650
        %1667 = vst [vmem:[%s227 + $0x158] sm:$0xff] %v1651
        %1668 = vst [vmem:[%s227 + $0x178] sm:$0xff] %v1652
        %1669 = vst [vmem:[%s227 + $0x198] sm:$0xff] %v1653
        %1670 = vst [vmem:[%s227 + $0x1b8] sm:$0xff] %v1654
        %1671 = vst [vmem:[%s227 + $0x1d8] sm:$0xff] %v1655
        %1672 = vst [vmem:[%s227 + $0x1f8] sm:$0xff] %v1656
        %s1673 = sand.u32 %s131, 1
        %s1674 = scalar_lea.sflag [#allocation4], %s1673
        %s1675 = sand.u32 %s131, 1
        %s1676 = smul.addr %s1675, 512
        %s1677 = scalar_lea.vmem [#allocation7], %s1676
        // Predicated region
        $region45: #{tpu_custom_call.1} parent=35 // pred_check
          %p1678 = pneg %p141
        $region46: #{tpu_custom_call.1} parent=35 // pred_check_branch
          %1680 = sbr.rel (%p1678) target = $region48
        $region47: #{tpu_custom_call.1} parent=35 // pred_region
          %s1681 = smul.u32 16, %s24
          %s1683 = ssub.s32 8192, 8192
          %1684 = vsyncadd %s1674, %s1683
          %s1685 = smul.addr %s25, 4
          %s1686 = smul.addr %s1681, 16
          %s1687 = sadd.s32 %s1685, %s1686
          %s1688 = smul.addr %s1687, 128
          %s1689 = scalar_lea.hbm %s4, %s1688
          %s1690 = sshll.u32 %s1677, 4
          %s1691 = int_to_ptr.vmem [resolvable:$true] %s1690
          %1696 = dma.vmem_to_hbm [thread:$0]  %s1691, 8192, %s1689, %s1674, 512, 2048, 32
        $region48: #{tpu_custom_call.1} parent=35 // pred_fallthru
          _
      $region36: #{tpu_custom_call.1} parent=5 // pred_fallthru
        _
      %p1697 = scmp.le.s32.totalorder 2, %s15
      // Predicated region
      $region49: #{tpu_custom_call.1} parent=5 // pred_check
        %p1698 = pneg %p1697
      $region50: #{tpu_custom_call.1} parent=5 // pred_check_branch
        %1700 = sbr.rel (%p1698) target = $region52
      $region51: #{tpu_custom_call.1} parent=5 // pred_region
        %s1701 = ssub.s32 %s15, 2
        // Predicated region
        $region53: #{tpu_custom_call.1} parent=51 // pred_check
          %p1702 = pneg %p147
        $region54: #{tpu_custom_call.1} parent=51 // pred_check_branch
          %1704 = sbr.rel (%p1702) target = $region56
        $region55: #{tpu_custom_call.1} parent=51 // pred_region
          %s1705 = sand.u32 %s132, 1
          %s1706 = scalar_lea.sflag [#allocation4], %s1705
          %s1707 = sand.u32 %s132, 1
          %s1708 = smul.addr %s1707, 512
          %s1709 = scalar_lea.vmem [#allocation7], %s1708
          %1710 = dma.done %s1706, 8192
        $region56: #{tpu_custom_call.1} parent=51 // pred_fallthru
          _
      $region52: #{tpu_custom_call.1} parent=5 // pred_fallthru
        _
    $region6: #{tpu_custom_call.1} parent=1 // loop_footer
      %s19 = sadd.s32 1, %s15
    $region7: #{tpu_custom_call.1} parent=1 // loop_footer_branch
      %14 = sbr.rel target = $region3
    $region8: #{tpu_custom_call.1} parent=1 // loop_exit
      _
    %1711 = vsyncpa [#allocation3], 1
    %s1712 = scalar_lea.sflag [#allocation3], 1
    %1713 = vsyncpa %s1712, 1
    %1714 = vsyncpa [#allocation6], 1
    %1715 = vsyncpa [#allocation4], 1
    %s1716 = scalar_lea.sflag [#allocation4], 1
    %1717 = vsyncpa %s1716, 1

</llo_original>
